<compile_context>
chip_gen: v7x
topology: tpu7x:2x2x1
jax: 0.10.0
libtpu: 0.0.40
codegen_flags: <defaults>
</compile_context>

<pallas_src>
import functools

import jax
import jax.numpy as jnp
from jax.experimental import pallas as pl
from jax.experimental.pallas import tpu as pltpu


# ----------------------------------------------------------------------------
# Small utilities
# ----------------------------------------------------------------------------

def _round_up(v, m):
    return ((v + m - 1) // m) * m


def _hw_config():
    """Generation-gated tile budgets / scoped-VMEM limits."""
    try:
        vmem_cap = int(pltpu.get_tpu_info().vmem_capacity_bytes)
    except Exception:
        vmem_cap = 64 << 20                      # assume v7x-like (conservative)
    if vmem_cap >= (100 << 20):                  # v5e / v6e: 128 MiB physical
        return dict(enc_budget=12 << 20, enc_vmem=64 << 20, dec_vmem=48 << 20)
    return dict(enc_budget=6 << 20, enc_vmem=40 << 20, dec_vmem=40 << 20)  # v7x


def _point_tile(N, budget_bytes):
    """Pick a lane-axis point tile (multiple of 128) for the encoder.

    per_point covers the sublane-padded (8, tn) f32 x block (double-buffered)
    plus the f32+bf16 slabs of the 32/64/128-channel intermediates.
    Returns (tn, n_pad); if n_pad != N the wrapper edge-pads (duplicated
    points are exact for a pointwise-conv + max-pool).
    """
    per_point = 1280
    cap = max(128, (budget_bytes // per_point) // 128 * 128)
    if N <= cap:
        return N, N                      # single tile; tn == full dim is legal
    return cap, _round_up(N, cap)


def _col_tile(out_pad, cap=1024):
    """Largest multiple-of-128 divisor of out_pad that is <= cap."""
    t = max(128, (min(out_pad, cap) // 128) * 128)
    while out_pad % t != 0:
        t -= 128
    return t


# ----------------------------------------------------------------------------
# Fused encoder: 1x1-conv stack + max-over-points + FC head + reparametrization
# ----------------------------------------------------------------------------

def _encoder_kernel(*refs, n_conv, n_fc, latent_dim):
    x_ref = refs[0]                                    # (1, 3, tn)
    conv_wb = refs[1:1 + 2 * n_conv]                   # (W^T (c_out,c_in), b (c_out,1))
    fc_wb = refs[1 + 2 * n_conv:1 + 2 * (n_conv + n_fc)]
    eps_ref = refs[1 + 2 * (n_conv + n_fc)]            # (1, L, 1)
    o_ref = refs[2 + 2 * (n_conv + n_fc)]              # (1, L, 1)
    max_ref = refs[3 + 2 * (n_conv + n_fc)]            # (c_out, 1) scratch

    i = pl.program_id(1)

    @pl.when(i == 0)
    def _():
        max_ref[...] = jnp.full(max_ref.shape, -jnp.inf, max_ref.dtype)

    x = x_ref[0]                                       # (3, tn) f32, points on lanes

    # Conv 1 (K=3): three broadcast FMAs on the VPU (the MXU is idle during
    # layer 1; a K=3 matmul would be >95% contraction padding).
    w1 = conv_wb[0][...]                               # (c1, 3) f32
    b1 = conv_wb[1][...]                               # (c1, 1) f32
    h = (w1[:, 0:1] * x[0:1, :] + w1[:, 1:2] * x[1:2, :]
         + w1[:, 2:3] * x[2:3, :] + b1)
    h = jnp.maximum(h, 0.0)

    # Remaining 1x1 convs on the MXU: bf16 inputs, f32 accumulation; bias/ReLU
    # stay f32.  Intermediates never touch HBM.
    for l in range(1, n_conv):
        w = conv_wb[2 * l][...]                        # (c_out, c_in) bf16
        b = conv_wb[2 * l + 1][...]                    # (c_out, 1) f32
        h = jnp.dot(w, h.astype(jnp.bfloat16),
                    preferred_element_type=jnp.float32) + b
        h = jnp.maximum(h, 0.0)

    # Max over this point tile (XLU lane reduction) folded into the running max.
    max_ref[...] = jnp.maximum(max_ref[...], jnp.max(h, axis=1, keepdims=True))

    # Last point tile of this batch: FC head + VAE reparametrization epilogue.
    @pl.when(i == pl.num_programs(1) - 1)
    def _():
        g = max_ref[...]                               # (c_out, 1)
        for l in range(n_fc):
            w = fc_wb[2 * l][...]                      # (f_out, f_in) f32
            b = fc_wb[2 * l + 1][...]                  # (f_out, 1) f32
            g = jnp.dot(w, g, preferred_element_type=jnp.float32) + b
            if l < n_fc - 1:
                g = jnp.maximum(g, 0.0)
        z_mu = g[:latent_dim, :]
        z_var = g[latent_dim:, :]
        eps = eps_ref[0]                               # (L, 1), uniform [0,1)
        o_ref[0] = (z_mu + eps * jnp.exp(0.5 * z_var)).astype(o_ref.dtype)


def encoder_forward(params, x_ncl, eps, latent_dim, *, budget, vmem_limit):
    """x_ncl: native PyTorch Conv1d NCL layout (B, 3, N) -> latent (B, L)."""
    B, _, N = x_ncl.shape
    tn, n_pad = _point_tile(N, budget)
    if n_pad != N:
        # Edge-duplicate points: pointwise convs + max pooling are invariant to
        # repeated points, so this padding is exact (no masking needed).
        x_ncl = jnp.pad(x_ncl, ((0, 0), (0, 0), (0, n_pad - N)), mode="edge")
    n_tiles = n_pad // tn
    c_out = params["conv"][-1][0].shape[0]

    operands = [x_ncl]
    in_specs = [pl.BlockSpec((1, 3, tn), lambda b, i: (b, 0, i))]
    for w, bias in params["conv"] + params["fc"]:
        operands += [w, bias]
        in_specs += [pl.BlockSpec(w.shape, lambda b, i: (0, 0)),
                     pl.BlockSpec(bias.shape, lambda b, i: (0, 0))]
    operands.append(eps.reshape(B, latent_dim, 1))
    in_specs.append(pl.BlockSpec((1, latent_dim, 1), lambda b, i: (b, 0, 0)))

    kern = functools.partial(_encoder_kernel, n_conv=len(params["conv"]),
                             n_fc=len(params["fc"]), latent_dim=latent_dim)
    out = pl.pallas_call(
        kern,
        out_shape=jax.ShapeDtypeStruct((B, latent_dim, 1), jnp.float32),
        grid=(B, n_tiles),
        in_specs=in_specs,
        out_specs=pl.BlockSpec((1, latent_dim, 1), lambda b, i: (b, 0, 0)),
        scratch_shapes=[pltpu.VMEM((c_out, 1), jnp.float32)],
        compiler_params=pltpu.CompilerParams(
            dimension_semantics=("parallel", "arbitrary"),   # batch -> 2nd core on v7x
            vmem_limit_bytes=vmem_limit),
    )(*operands)
    return out.reshape(B, latent_dim)


# ----------------------------------------------------------------------------
# Fused decoder: latent -> 1024 -> 2048 -> num_points*3 in one launch
# ----------------------------------------------------------------------------

def _decoder_kernel(z_ref, w1_ref, b1_ref, w2_ref, b2_ref, w3_ref, b3_ref,
                    o_ref, h_ref):
    # First grid step: run the two small LeakyReLU layers once, park the
    # hidden activation in VMEM scratch (bf16) for all output-column tiles.
    @pl.when(pl.program_id(0) == 0)
    def _():
        z = z_ref[...].astype(jnp.bfloat16)
        h = jnp.dot(z, w1_ref[...],
                    preferred_element_type=jnp.float32) + b1_ref[...]
        h = jnp.where(h > 0.0, h, 0.01 * h)             # PyTorch LeakyReLU default
        h = jnp.dot(h.astype(jnp.bfloat16), w2_ref[...],
                    preferred_element_type=jnp.float32) + b2_ref[...]
        h = jnp.where(h > 0.0, h, 0.01 * h)
        h_ref[...] = h.astype(h_ref.dtype)

    # Every step: one lane tile of the last (weight-streaming-bound) layer.
    o_ref[...] = (jnp.dot(h_ref[...], w3_ref[...],
                          preferred_element_type=jnp.float32)
                  + b3_ref[...]).astype(o_ref.dtype)


def decoder_forward(params, config, z, *, dec_vmem):
    (w1, b1), (w2, b2), (w3, b3) = params["dec"]
    B = z.shape[0]
    num_points = config["num_points"]
    K1, H1 = w1.shape
    H2 = w2.shape[1]
    out_pad = w3.shape[1]                         # 128-lane-padded output width
    nt = _col_tile(out_pad, 1024)                 # large lane tiles on all gens
    n_steps = out_pad // nt

    w3_kwargs = {}
    if n_steps > 2:
        # Decoder is weight-DMA bound at tiny M=B: keep two streamed weight
        # transfers in flight across block switches.
        w3_kwargs["pipeline_mode"] = pl.Buffered(3)

    out = pl.pallas_call(
        _decoder_kernel,
        out_shape=jax.ShapeDtypeStruct((B, out_pad), jnp.float32),
        grid=(n_steps,),
        in_specs=[
            pl.BlockSpec((B, K1), lambda j: (0, 0)),
            pl.BlockSpec((K1, H1), lambda j: (0, 0)),     # resident
            pl.BlockSpec((1, H1), lambda j: (0, 0)),
            pl.BlockSpec((H1, H2), lambda j: (0, 0)),     # resident (4 MiB bf16)
            pl.BlockSpec((1, H2), lambda j: (0, 0)),
            pl.BlockSpec((H2, nt), lambda j: (0, j), **w3_kwargs),  # streamed
            pl.BlockSpec((1, nt), lambda j: (0, j)),
        ],
        out_specs=pl.BlockSpec((B, nt), lambda j: (0, j)),
        scratch_shapes=[pltpu.VMEM((B, H2), jnp.bfloat16)],
        compiler_params=pltpu.CompilerParams(
            dimension_semantics=("arbitrary",),
            vmem_limit_bytes=dec_vmem),
    )(z, w1, b1, w2, b2, w3, b3)
    return out[:, :num_points * 3].reshape(B, num_points, 3)


# ----------------------------------------------------------------------------
# Parameter construction (deterministic, PyTorch-style uniform init)
# ----------------------------------------------------------------------------

def _bn_params(key, c):
    kg, kb = jax.random.split(key)
    gamma = 1.0 + 0.05 * jax.random.normal(kg, (c,), jnp.float32)
    beta = 0.05 * jax.random.normal(kb, (c,), jnp.float32)
    return gamma, beta, jnp.zeros((c,), jnp.float32), jnp.ones((c,), jnp.float32)


def init_params(config, key):
    L = config["latent_dim"]
    conv_sizes = list(config["conv_layers_size"]) + [config["conv_out_dim"]]
    fc_sizes = list(config["fc_layers_size"])
    keys = jax.random.split(key, 64)
    ki = iter(range(64))

    params = {"conv": [], "fc": [], "dec": []}

    # Encoder 1x1 convs, weights stored transposed (c_out, c_in) for the
    # channels-on-sublanes orientation; eval-mode BN folded in.
    c_in = 3
    for li, c_out in enumerate(conv_sizes):
        kw, kb = jax.random.split(keys[next(ki)])
        bound = 1.0 / (c_in ** 0.5)
        w = jax.random.uniform(kw, (c_out, c_in), jnp.float32, -bound, bound)
        b = jax.random.uniform(kb, (c_out,), jnp.float32, -bound, bound)
        gamma, beta, rmean, rvar = _bn_params(keys[next(ki)], c_out)
        scale = gamma / jnp.sqrt(rvar + 1e-5)
        w = w * scale[:, None]
        b = (b - rmean) * scale + beta
        wdtype = jnp.float32 if li == 0 else jnp.bfloat16   # first conv = f32 VPU FMAs
        params["conv"].append((w.astype(wdtype), b.reshape(c_out, 1)))
        c_in = c_out

    # Encoder FC head: conv_out_dim -> fc_layers_size... -> 2L (f32, tiny).
    f_in = config["conv_out_dim"]
    for f_out in fc_sizes + [2 * L]:
        kw, kb = jax.random.split(keys[next(ki)])
        bound = 1.0 / (f_in ** 0.5)
        w = jax.random.uniform(kw, (f_out, f_in), jnp.float32, -bound, bound)
        b = jax.random.uniform(kb, (f_out, 1), jnp.float32, -bound, bound)
        params["fc"].append((w, b))
        f_in = f_out

    # Decoder: latent_dim -> 1024 -> 2048 -> num_points*3 (bf16 weights,
    # last layer lane-padded to a multiple of 128 for unmasked stores).
    out_true = config["num_points"] * 3
    out_pad = _round_up(out_true, 128)
    dims = [L, 1024, 2048, out_true]
    for idx, (d_in, d_out) in enumerate(zip(dims[:-1], dims[1:])):
        kw, kb = jax.random.split(keys[next(ki)])
        bound = 1.0 / (d_in ** 0.5)
        w = jax.random.uniform(kw, (d_in, d_out), jnp.float32, -bound, bound)
        b = jax.random.uniform(kb, (d_out,), jnp.float32, -bound, bound)
        if idx == 2 and d_out != out_pad:
            w = jnp.pad(w, ((0, 0), (0, out_pad - d_out)))
            b = jnp.pad(b, ((0, out_pad - d_out),))
        params["dec"].append((w.astype(jnp.bfloat16),
                              b.reshape(1, -1).astype(jnp.float32)))
    return params


# ----------------------------------------------------------------------------
# Forward pass
# ----------------------------------------------------------------------------

def pointnet_vae_forward(params, config, x_ncl, rng_key):
    L = config["latent_dim"]
    B = x_ncl.shape[0]
    hw = _hw_config()
    # rand_like -> uniform [0,1); reparametrization always runs (PyTorch
    # `if self.train:` tests a bound method, which is always truthy).
    eps = jax.random.uniform(rng_key, (B, L), jnp.float32)
    latent = encoder_forward(params, x_ncl, eps, L,
                             budget=hw["enc_budget"], vmem_limit=hw["enc_vmem"])
    # Decoder consumes latent[..., :latent_dim] (identity after reparam).
    return decoder_forward(params, config, latent, dec_vmem=hw["dec_vmem"])


# ----------------------------------------------------------------------------

if __name__ == "__main__":
    config = {
        "latent_dim": 8,
        "num_points": 16,
        "conv_out_dim": 128,
        "conv_layers_size": [32, 64],
        "fc_layers_size": [64],
        "transformers_position": [],
    }

    root = jax.random.PRNGKey(0)
    k_params, k_input, k_eps = jax.random.split(root, 3)

    params = init_params(config, k_params)

    B = 2
    # PyTorch Conv1d NCL layout: (batch, 3 coords, num_points)
    x = jax.random.normal(k_input, (B, 3, config["num_points"]), jnp.float32)

    out = pointnet_vae_forward(params, config, x, k_eps)
    out = jax.block_until_ready(out)

    assert out.shape == (B, config["num_points"], 3), out.shape
    assert bool(jnp.all(jnp.isfinite(out)))
    print("KERNEL_OK")
</pallas_src>

<mosaic_0001>
module attributes {stable_mosaic.version = 11 : i64} {
  func.func @_encoder_kernel(%arg0: i32, %arg1: i32, %arg2: memref<1x3x16xf32, #tpu.memory_space<vmem>>, %arg3: memref<32x3xf32, #tpu.memory_space<vmem>>, %arg4: memref<32x1xf32, #tpu.memory_space<vmem>>, %arg5: memref<64x32xbf16, #tpu.memory_space<vmem>>, %arg6: memref<64x1xf32, #tpu.memory_space<vmem>>, %arg7: memref<128x64xbf16, #tpu.memory_space<vmem>>, %arg8: memref<128x1xf32, #tpu.memory_space<vmem>>, %arg9: memref<64x128xf32, #tpu.memory_space<vmem>>, %arg10: memref<64x1xf32, #tpu.memory_space<vmem>>, %arg11: memref<16x64xf32, #tpu.memory_space<vmem>>, %arg12: memref<16x1xf32, #tpu.memory_space<vmem>>, %arg13: memref<1x8x1xf32, #tpu.memory_space<vmem>>, %arg14: memref<1x8x1xf32, #tpu.memory_space<vmem>>, %arg15: memref<128x1xf32, #tpu.memory_space<vmem>>) attributes {dimension_semantics = [#tpu.dimension_semantics<parallel>, #tpu.dimension_semantics<arbitrary>], iteration_bounds = array<i64: 2, 1>, scalar_prefetch = 0 : i64, scratch_operands = 1 : i64, tpu.core_type = #tpu.core_type<tc>, window_params = [{transform_indices = @transform_0, window_bounds = array<i64: 1, 3, 16>}, {pipeline_mode = #tpu.pipeline_mode<synchronous>, transform_indices = @transform_1, window_bounds = array<i64: 32, 3>}, {pipeline_mode = #tpu.pipeline_mode<synchronous>, transform_indices = @transform_2, window_bounds = array<i64: 32, 1>}, {pipeline_mode = #tpu.pipeline_mode<synchronous>, transform_indices = @transform_3, window_bounds = array<i64: 64, 32>}, {pipeline_mode = #tpu.pipeline_mode<synchronous>, transform_indices = @transform_4, window_bounds = array<i64: 64, 1>}, {pipeline_mode = #tpu.pipeline_mode<synchronous>, transform_indices = @transform_5, window_bounds = array<i64: 128, 64>}, {pipeline_mode = #tpu.pipeline_mode<synchronous>, transform_indices = @transform_6, window_bounds = array<i64: 128, 1>}, {pipeline_mode = #tpu.pipeline_mode<synchronous>, transform_indices = @transform_7, window_bounds = array<i64: 64, 128>}, {pipeline_mode = #tpu.pipeline_mode<synchronous>, transform_indices = @transform_8, window_bounds = array<i64: 64, 1>}, {pipeline_mode = #tpu.pipeline_mode<synchronous>, transform_indices = @transform_9, window_bounds = array<i64: 16, 64>}, {pipeline_mode = #tpu.pipeline_mode<synchronous>, transform_indices = @transform_10, window_bounds = array<i64: 16, 1>}, {transform_indices = @transform_11, window_bounds = array<i64: 1, 8, 1>}, {transform_indices = @transform_12, window_bounds = array<i64: 1, 8, 1>}]} {
    %c0_i32 = arith.constant 0 : i32
    %0 = arith.cmpi eq, %arg1, %c0_i32 : i32
    %1 = arith.extui %0 : i1 to i32
    %c0_i32_0 = arith.constant 0 : i32
    %2 = arith.cmpi ne, %1, %c0_i32_0 : i32
    scf.if %2 {
      %cst_26 = arith.constant 0xFF800000 : f32
      %52 = vector.broadcast %cst_26 : f32 to vector<128x1xf32>
      %c0_27 = arith.constant 0 : index
      %c0_28 = arith.constant 0 : index
      %53 = vector.load %arg15[%c0_27, %c0_28] : memref<128x1xf32, #tpu.memory_space<vmem>>, vector<128x1xf32>
      tpu.vector_store %arg15[%c0_27, %c0_28], %52 {strides = array<i32>} : memref<128x1xf32, #tpu.memory_space<vmem>>, vector<128x1xf32>,
    } else {
    }
    %c0 = arith.constant 0 : index
    %c0_1 = arith.constant 0 : index
    %c0_2 = arith.constant 0 : index
    %3 = vector.load %arg2[%c0, %c0_1, %c0_2] : memref<1x3x16xf32, #tpu.memory_space<vmem>>, vector<1x3x16xf32>
    %4 = vector.shape_cast %3 : vector<1x3x16xf32> to vector<3x16xf32>
    %c0_3 = arith.constant 0 : index
    %c0_4 = arith.constant 0 : index
    %5 = vector.load %arg3[%c0_3, %c0_4] : memref<32x3xf32, #tpu.memory_space<vmem>>, vector<32x3xf32>
    %c0_5 = arith.constant 0 : index
    %c0_6 = arith.constant 0 : index
    %6 = vector.load %arg4[%c0_5, %c0_6] : memref<32x1xf32, #tpu.memory_space<vmem>>, vector<32x1xf32>
    %7 = vector.extract_strided_slice %5 {offsets = [0, 0], sizes = [32, 1], strides = [1, 1]} : vector<32x3xf32> to vector<32x1xf32>
    %8 = vector.extract_strided_slice %4 {offsets = [0, 0], sizes = [1, 16], strides = [1, 1]} : vector<3x16xf32> to vector<1x16xf32>
    %9 = vector.broadcast %7 : vector<32x1xf32> to vector<32x16xf32>
    %10 = vector.broadcast %8 : vector<1x16xf32> to vector<32x16xf32>
    %11 = arith.mulf %9, %10 : vector<32x16xf32>
    %12 = vector.extract_strided_slice %5 {offsets = [0, 1], sizes = [32, 1], strides = [1, 1]} : vector<32x3xf32> to vector<32x1xf32>
    %13 = vector.extract_strided_slice %4 {offsets = [1, 0], sizes = [1, 16], strides = [1, 1]} : vector<3x16xf32> to vector<1x16xf32>
    %14 = vector.broadcast %12 : vector<32x1xf32> to vector<32x16xf32>
    %15 = vector.broadcast %13 : vector<1x16xf32> to vector<32x16xf32>
    %16 = arith.mulf %14, %15 : vector<32x16xf32>
    %17 = arith.addf %11, %16 : vector<32x16xf32>
    %18 = vector.extract_strided_slice %5 {offsets = [0, 2], sizes = [32, 1], strides = [1, 1]} : vector<32x3xf32> to vector<32x1xf32>
    %19 = vector.extract_strided_slice %4 {offsets = [2, 0], sizes = [1, 16], strides = [1, 1]} : vector<3x16xf32> to vector<1x16xf32>
    %20 = vector.broadcast %18 : vector<32x1xf32> to vector<32x16xf32>
    %21 = vector.broadcast %19 : vector<1x16xf32> to vector<32x16xf32>
    %22 = arith.mulf %20, %21 : vector<32x16xf32>
    %23 = arith.addf %17, %22 : vector<32x16xf32>
    %24 = vector.broadcast %6 : vector<32x1xf32> to vector<32x16xf32>
    %25 = arith.addf %23, %24 : vector<32x16xf32>
    %cst = arith.constant 0.000000e+00 : f32
    %26 = vector.broadcast %cst : f32 to vector<32x16xf32>
    %27 = arith.maximumf %25, %26 : vector<32x16xf32>
    %c0_7 = arith.constant 0 : index
    %c0_8 = arith.constant 0 : index
    %28 = vector.load %arg5[%c0_7, %c0_8] : memref<64x32xbf16, #tpu.memory_space<vmem>>, vector<64x32xbf16>
    %c0_9 = arith.constant 0 : index
    %c0_10 = arith.constant 0 : index
    %29 = vector.load %arg6[%c0_9, %c0_10] : memref<64x1xf32, #tpu.memory_space<vmem>>, vector<64x1xf32>
    %30 = arith.truncf %27 : vector<32x16xf32> to vector<32x16xbf16>
    %cst_11 = arith.constant dense<0.000000e+00> : vector<64x16xf32>
    %31 = tpu.matmul %28, %30, %cst_11 {dimension_numbers = #tpu.dot_dimension_numbers<[1], [0], [0], [1], [0, 0, 1, 1], [], []>} : vector<64x32xbf16>, vector<32x16xbf16>, vector<64x16xf32> -> vector<64x16xf32>
    %32 = vector.broadcast %29 : vector<64x1xf32> to vector<64x16xf32>
    %33 = arith.addf %31, %32 : vector<64x16xf32>
    %cst_12 = arith.constant 0.000000e+00 : f32
    %34 = vector.broadcast %cst_12 : f32 to vector<64x16xf32>
    %35 = arith.maximumf %33, %34 : vector<64x16xf32>
    %c0_13 = arith.constant 0 : index
    %c0_14 = arith.constant 0 : index
    %36 = vector.load %arg7[%c0_13, %c0_14] : memref<128x64xbf16, #tpu.memory_space<vmem>>, vector<128x64xbf16>
    %c0_15 = arith.constant 0 : index
    %c0_16 = arith.constant 0 : index
    %37 = vector.load %arg8[%c0_15, %c0_16] : memref<128x1xf32, #tpu.memory_space<vmem>>, vector<128x1xf32>
    %38 = arith.truncf %35 : vector<64x16xf32> to vector<64x16xbf16>
    %cst_17 = arith.constant dense<0.000000e+00> : vector<128x16xf32>
    %39 = tpu.matmul %36, %38, %cst_17 {dimension_numbers = #tpu.dot_dimension_numbers<[1], [0], [0], [1], [0, 0, 1, 1], [], []>} : vector<128x64xbf16>, vector<64x16xbf16>, vector<128x16xf32> -> vector<128x16xf32>
    %40 = vector.broadcast %37 : vector<128x1xf32> to vector<128x16xf32>
    %41 = arith.addf %39, %40 : vector<128x16xf32>
    %cst_18 = arith.constant 0.000000e+00 : f32
    %42 = vector.broadcast %cst_18 : f32 to vector<128x16xf32>
    %43 = arith.maximumf %41, %42 : vector<128x16xf32>
    %c0_19 = arith.constant 0 : index
    %c0_20 = arith.constant 0 : index
    %44 = vector.load %arg15[%c0_19, %c0_20] : memref<128x1xf32, #tpu.memory_space<vmem>>, vector<128x1xf32>
    %cst_21 = arith.constant dense<0xFF800000> : vector<128xf32>
    %45 = vector.multi_reduction <maximumf>, %43, %cst_21 [1] : vector<128x16xf32> to vector<128xf32>
    %46 = vector.shape_cast %45 : vector<128xf32> to vector<128x1xf32>
    %47 = arith.maximumf %44, %46 : vector<128x1xf32>
    %c0_22 = arith.constant 0 : index
    %c0_23 = arith.constant 0 : index
    %48 = vector.load %arg15[%c0_22, %c0_23] : memref<128x1xf32, #tpu.memory_space<vmem>>, vector<128x1xf32>
    tpu.vector_store %arg15[%c0_22, %c0_23], %47 {strides = array<i32>} : memref<128x1xf32, #tpu.memory_space<vmem>>, vector<128x1xf32>,
    %c0_i32_24 = arith.constant 0 : i32
    %49 = arith.cmpi eq, %arg1, %c0_i32_24 : i32
    %50 = arith.extui %49 : i1 to i32
    %c0_i32_25 = arith.constant 0 : i32
    %51 = arith.cmpi ne, %50, %c0_i32_25 : i32
    scf.if %51 {
      %c0_26 = arith.constant 0 : index
      %c0_27 = arith.constant 0 : index
      %52 = vector.load %arg15[%c0_26, %c0_27] : memref<128x1xf32, #tpu.memory_space<vmem>>, vector<128x1xf32>
      %c0_28 = arith.constant 0 : index
      %c0_29 = arith.constant 0 : index
      %53 = vector.load %arg9[%c0_28, %c0_29] : memref<64x128xf32, #tpu.memory_space<vmem>>, vector<64x128xf32>
      %c0_30 = arith.constant 0 : index
      %c0_31 = arith.constant 0 : index
      %54 = vector.load %arg10[%c0_30, %c0_31] : memref<64x1xf32, #tpu.memory_space<vmem>>, vector<64x1xf32>
      %cst_32 = arith.constant dense<0.000000e+00> : vector<64x1xf32>
      %55 = tpu.matmul %53, %52, %cst_32 {dimension_numbers = #tpu.dot_dimension_numbers<[1], [0], [0], [1], [0, 0, 1, 1], [], []>} : vector<64x128xf32>, vector<128x1xf32>, vector<64x1xf32> -> vector<64x1xf32>
      %56 = arith.addf %55, %54 : vector<64x1xf32>
      %cst_33 = arith.constant 0.000000e+00 : f32
      %57 = vector.broadcast %cst_33 : f32 to vector<64x1xf32>
      %58 = arith.maximumf %56, %57 : vector<64x1xf32>
      %c0_34 = arith.constant 0 : index
      %c0_35 = arith.constant 0 : index
      %59 = vector.load %arg11[%c0_34, %c0_35] : memref<16x64xf32, #tpu.memory_space<vmem>>, vector<16x64xf32>
      %c0_36 = arith.constant 0 : index
      %c0_37 = arith.constant 0 : index
      %60 = vector.load %arg12[%c0_36, %c0_37] : memref<16x1xf32, #tpu.memory_space<vmem>>, vector<16x1xf32>
      %cst_38 = arith.constant dense<0.000000e+00> : vector<16x1xf32>
      %61 = tpu.matmul %59, %58, %cst_38 {dimension_numbers = #tpu.dot_dimension_numbers<[1], [0], [0], [1], [0, 0, 1, 1], [], []>} : vector<16x64xf32>, vector<64x1xf32>, vector<16x1xf32> -> vector<16x1xf32>
      %62 = arith.addf %61, %60 : vector<16x1xf32>
      %63 = vector.extract_strided_slice %62 {offsets = [0, 0], sizes = [8, 1], strides = [1, 1]} : vector<16x1xf32> to vector<8x1xf32>
      %64 = vector.extract_strided_slice %62 {offsets = [8, 0], sizes = [8, 1], strides = [1, 1]} : vector<16x1xf32> to vector<8x1xf32>
      %c0_39 = arith.constant 0 : index
      %c0_40 = arith.constant 0 : index
      %c0_41 = arith.constant 0 : index
      %65 = vector.load %arg13[%c0_39, %c0_40, %c0_41] : memref<1x8x1xf32, #tpu.memory_space<vmem>>, vector<1x8x1xf32>
      %66 = vector.shape_cast %65 : vector<1x8x1xf32> to vector<8x1xf32>
      %cst_42 = arith.constant 5.000000e-01 : f32
      %67 = vector.broadcast %cst_42 : f32 to vector<8x1xf32>
      %68 = arith.mulf %67, %64 : vector<8x1xf32>
      %69 = math.exp %68 : vector<8x1xf32>
      %70 = arith.mulf %66, %69 : vector<8x1xf32>
      %71 = arith.addf %63, %70 : vector<8x1xf32>
      %c0_43 = arith.constant 0 : index
      %c0_44 = arith.constant 0 : index
      %c0_45 = arith.constant 0 : index
      %72 = vector.load %arg14[%c0_43, %c0_44, %c0_45] : memref<1x8x1xf32, #tpu.memory_space<vmem>>, vector<1x8x1xf32>
      %73 = vector.shape_cast %72 : vector<1x8x1xf32> to vector<8x1xf32>
      %74 = vector.shape_cast %71 : vector<8x1xf32> to vector<1x8x1xf32>
      tpu.vector_store %arg14[%c0_43, %c0_44, %c0_45], %74 {strides = array<i32>} : memref<1x8x1xf32, #tpu.memory_space<vmem>>, vector<1x8x1xf32>,
    } else {
    }
    return
  }
  func.func @transform_0(%arg0: i32, %arg1: i32) -> (i32, i32, i32) {
    %c0_i32 = arith.constant 0 : i32
    %c0_i32_0 = arith.constant 0 : i32
    return %arg0, %c0_i32, %arg1 : i32, i32, i32
  }
  func.func @transform_1(%arg0: i32, %arg1: i32) -> (i32, i32) {
    %c0_i32 = arith.constant 0 : i32
    %c0_i32_0 = arith.constant 0 : i32
    %c0_i32_1 = arith.constant 0 : i32
    return %c0_i32, %c0_i32_0 : i32, i32
  }
  func.func @transform_2(%arg0: i32, %arg1: i32) -> (i32, i32) {
    %c0_i32 = arith.constant 0 : i32
    %c0_i32_0 = arith.constant 0 : i32
    %c0_i32_1 = arith.constant 0 : i32
    return %c0_i32, %c0_i32_0 : i32, i32
  }
  func.func @transform_3(%arg0: i32, %arg1: i32) -> (i32, i32) {
    %c0_i32 = arith.constant 0 : i32
    %c0_i32_0 = arith.constant 0 : i32
    %c0_i32_1 = arith.constant 0 : i32
    return %c0_i32, %c0_i32_0 : i32, i32
  }
  func.func @transform_4(%arg0: i32, %arg1: i32) -> (i32, i32) {
    %c0_i32 = arith.constant 0 : i32
    %c0_i32_0 = arith.constant 0 : i32
    %c0_i32_1 = arith.constant 0 : i32
    return %c0_i32, %c0_i32_0 : i32, i32
  }
  func.func @transform_5(%arg0: i32, %arg1: i32) -> (i32, i32) {
    %c0_i32 = arith.constant 0 : i32
    %c0_i32_0 = arith.constant 0 : i32
    %c0_i32_1 = arith.constant 0 : i32
    return %c0_i32, %c0_i32_0 : i32, i32
  }
  func.func @transform_6(%arg0: i32, %arg1: i32) -> (i32, i32) {
    %c0_i32 = arith.constant 0 : i32
    %c0_i32_0 = arith.constant 0 : i32
    %c0_i32_1 = arith.constant 0 : i32
    return %c0_i32, %c0_i32_0 : i32, i32
  }
  func.func @transform_7(%arg0: i32, %arg1: i32) -> (i32, i32) {
    %c0_i32 = arith.constant 0 : i32
    %c0_i32_0 = arith.constant 0 : i32
    %c0_i32_1 = arith.constant 0 : i32
    return %c0_i32, %c0_i32_0 : i32, i32
  }
  func.func @transform_8(%arg0: i32, %arg1: i32) -> (i32, i32) {
    %c0_i32 = arith.constant 0 : i32
    %c0_i32_0 = arith.constant 0 : i32
    %c0_i32_1 = arith.constant 0 : i32
    return %c0_i32, %c0_i32_0 : i32, i32
  }
  func.func @transform_9(%arg0: i32, %arg1: i32) -> (i32, i32) {
    %c0_i32 = arith.constant 0 : i32
    %c0_i32_0 = arith.constant 0 : i32
    %c0_i32_1 = arith.constant 0 : i32
    return %c0_i32, %c0_i32_0 : i32, i32
  }
  func.func @transform_10(%arg0: i32, %arg1: i32) -> (i32, i32) {
    %c0_i32 = arith.constant 0 : i32
    %c0_i32_0 = arith.constant 0 : i32
    %c0_i32_1 = arith.constant 0 : i32
    return %c0_i32, %c0_i32_0 : i32, i32
  }
  func.func @transform_11(%arg0: i32, %arg1: i32) -> (i32, i32, i32) {
    %c0_i32 = arith.constant 0 : i32
    %c0_i32_0 = arith.constant 0 : i32
    %c0_i32_1 = arith.constant 0 : i32
    return %arg0, %c0_i32, %c0_i32_0 : i32, i32, i32
  }
  func.func @transform_12(%arg0: i32, %arg1: i32) -> (i32, i32, i32) {
    %c0_i32 = arith.constant 0 : i32
    %c0_i32_0 = arith.constant 0 : i32
    %c0_i32_1 = arith.constant 0 : i32
    return %arg0, %c0_i32, %c0_i32_0 : i32, i32, i32
  }
}

</mosaic_0001>

<llo_original>
// kernel: tpu_custom_call.1
$region0: #{tpu_custom_call.1}
  #allocation0 [shape = 'u32[]', space=smem, size = 0x4, offset = 0x4, fixed_abs, tag = 'smem constant byte address 0x4 - core index']
  #allocation1 [shape = 'u32[144,128]{1,0:T(1,128)}', space=vmem, size = 0x12000, scoped, tag = 'internal scratch']
  #allocation2 [shape = 'f32[128,1]{1,0:T(8,128)}', space=vmem, size = 0x10000, scoped, tag = 'scratch operand']
  %s0 = inlined_call_operand.vmem [shape: f32[2,3,16], index: 0, kind: input, shape index: {}]
  %s1 = inlined_call_operand.vmem [shape: f32[32,3], index: 1, kind: input, shape index: {}]
  %s2 = inlined_call_operand.vmem [shape: f32[32,1], index: 2, kind: input, shape index: {}]
  %s3 = inlined_call_operand.vmem [shape: bf16[64,32], index: 3, kind: input, shape index: {}]
  %s4 = inlined_call_operand.vmem [shape: f32[64,1], index: 4, kind: input, shape index: {}]
  %s5 = inlined_call_operand.vmem [shape: bf16[128,64], index: 5, kind: input, shape index: {}]
  %s6 = inlined_call_operand.vmem [shape: f32[128,1], index: 6, kind: input, shape index: {}]
  %s7 = inlined_call_operand.vmem [shape: f32[64,128], index: 7, kind: input, shape index: {}]
  %s8 = inlined_call_operand.vmem [shape: f32[64,1], index: 8, kind: input, shape index: {}]
  %s9 = inlined_call_operand.vmem [shape: f32[16,64], index: 9, kind: input, shape index: {}]
  %s10 = inlined_call_operand.vmem [shape: f32[16,1], index: 10, kind: input, shape index: {}]
  %s11 = inlined_call_operand.vmem [shape: f32[2,8,1], index: 11, kind: input, shape index: {}]
  %s12 = inlined_call_operand.vmem [shape: f32[2,8,1], index: 12, kind: output, shape index: {}]
  %s13 = sld [smem:[#allocation0]]
  $region89: #{tpu_custom_call.1} parent=0
    _
  %s15 = ssub.s32 1, %s13
  %s16 = scalar_select 0, %s15, %s13
  loop: start=0, step=1, limit=4
  $region2: #{tpu_custom_call.1} parent=0 // loop_pre_header
    _
  $region3: #{tpu_custom_call.1} parent=0 // loop_header
    %s18 = sphi 0, %s22
    %p19 = scmp.ge.s32.totalorder %s18, 4
    %s25 = sphi 0, %s37
    %s26 = sphi 0, %s33
    %s27 = sphi 0, %s25
    %s28 = sphi 0, %s26
    %s29 = sphi 0, %s27
    %s30 = sphi 0, %s28
    %s42 = sphi 0, %s44
    %s45 = sphi 0, %s42
    %s46 = sphi 0, %s45
    %s62 = sphi 0, %s46
    %s66 = sphi 0, %s66
    %s68 = sphi 0, %s66
    %s69 = sphi 0, %s68
    %s83 = sphi 0, %s69
    %s87 = sphi 0, %s87
    %s89 = sphi 0, %s87
    %s90 = sphi 0, %s89
    %s104 = sphi 0, %s90
    %s108 = sphi 0, %s108
    %s110 = sphi 0, %s108
    %s111 = sphi 0, %s110
    %s125 = sphi 0, %s111
    %s129 = sphi 0, %s129
    %s131 = sphi 0, %s129
    %s132 = sphi 0, %s131
    %s146 = sphi 0, %s132
    %s150 = sphi 0, %s150
    %s152 = sphi 0, %s150
    %s153 = sphi 0, %s152
    %s167 = sphi 0, %s153
    %s171 = sphi 0, %s171
    %s173 = sphi 0, %s171
    %s174 = sphi 0, %s173
    %s188 = sphi 0, %s174
    %s192 = sphi 0, %s192
    %s194 = sphi 0, %s192
    %s195 = sphi 0, %s194
    %s209 = sphi 0, %s195
    %s213 = sphi 0, %s213
    %s215 = sphi 0, %s213
    %s216 = sphi 0, %s215
    %s230 = sphi 0, %s216
    %s234 = sphi 0, %s234
    %s236 = sphi 0, %s234
    %s237 = sphi 0, %s236
    %s251 = sphi 0, %s237
    %s255 = sphi 0, %s255
    %s257 = sphi 0, %s255
    %s258 = sphi 0, %s257
    %s272 = sphi 0, %s258
    %s278 = sphi 0, %s280
    %s281 = sphi 0, %s278
    %s282 = sphi 0, %s281
    %s298 = sphi 0, %s282
    %s304 = sphi 0, %s306
    %s307 = sphi 0, %s304
    %s308 = sphi 0, %s307
    %s324 = sphi 0, %s308
  $region4: #{tpu_custom_call.1} parent=0 // loop_header_branch
    %21 = sbr.rel (%p19) target = $region8
  $region5: #{tpu_custom_call.1} parent=0 // loop_body
    %s23 = ssub.s32 %s18, 1
    %s24 = ssub.s32 %s18, 2
    %s31 = sadd.s32 1, %s26
    %p32 = scmp.ge.s32.totalorder %s31, 1
    %s33 = scalar_select %p32, 0, %s31
    %s34 = sadd.s32 1, %s25
    %s35 = scalar_select %p32, %s34, %s25
    %p36 = scmp.ge.s32.totalorder %s35, 2
    %s37 = scalar_select %p36, 0, %s35
    %s38 = ssub.s32 %s25, %s37
    %s39 = ssub.s32 %s26, %s33
    %s40 = sor.u32 %s38, %s39
    %p41 = scmp.eq.s32.totalorder %s40, 0
    %s43 = sadd.s32 %s42, 1
    %s44 = scalar_select %p41, %s42, %s43
    %p47 = pneg %p41
    %p48 = scmp.eq.s32.totalorder %s18, 1
    %p49 = por %p47, %p48
    %p50 = scmp.ne.s32.totalorder %s42, %s45
    %p51 = scmp.eq.s32.totalorder %s18, 0
    %p52 = por %p50, %p51
    %p53 = scmp.ne.s32.totalorder %s42, %s45
    %p54 = scmp.eq.s32.totalorder %s23, 1
    %p55 = por %p53, %p54
    %p56 = scmp.ne.s32.totalorder %s45, %s46
    %p57 = scmp.eq.s32.totalorder %s23, 0
    %p58 = por %p56, %p57
    %p59 = scmp.ne.s32.totalorder %s45, %s46
    %p60 = scmp.eq.s32.totalorder %s24, 1
    %p61 = por %p59, %p60
    %p63 = scmp.ne.s32.totalorder %s46, %s62
    %p64 = scmp.eq.s32.totalorder %s24, 0
    %p65 = por %p63, %p64
    %s67 = sadd.s32 %s66, 1
    %p70 = scmp.eq.s32.totalorder %s18, 1
    %p71 = scmp.ne.s32.totalorder %s66, %s68
    %p72 = scmp.eq.s32.totalorder %s18, 0
    %p73 = por %p71, %p72
    %p74 = scmp.ne.s32.totalorder %s66, %s68
    %p75 = scmp.eq.s32.totalorder %s23, 1
    %p76 = por %p74, %p75
    %p77 = scmp.ne.s32.totalorder %s68, %s69
    %p78 = scmp.eq.s32.totalorder %s23, 0
    %p79 = por %p77, %p78
    %p80 = scmp.ne.s32.totalorder %s68, %s69
    %p81 = scmp.eq.s32.totalorder %s24, 1
    %p82 = por %p80, %p81
    %p84 = scmp.ne.s32.totalorder %s69, %s83
    %p85 = scmp.eq.s32.totalorder %s24, 0
    %p86 = por %p84, %p85
    %s88 = sadd.s32 %s87, 1
    %p91 = scmp.eq.s32.totalorder %s18, 1
    %p92 = scmp.ne.s32.totalorder %s87, %s89
    %p93 = scmp.eq.s32.totalorder %s18, 0
    %p94 = por %p92, %p93
    %p95 = scmp.ne.s32.totalorder %s87, %s89
    %p96 = scmp.eq.s32.totalorder %s23, 1
    %p97 = por %p95, %p96
    %p98 = scmp.ne.s32.totalorder %s89, %s90
    %p99 = scmp.eq.s32.totalorder %s23, 0
    %p100 = por %p98, %p99
    %p101 = scmp.ne.s32.totalorder %s89, %s90
    %p102 = scmp.eq.s32.totalorder %s24, 1
    %p103 = por %p101, %p102
    %p105 = scmp.ne.s32.totalorder %s90, %s104
    %p106 = scmp.eq.s32.totalorder %s24, 0
    %p107 = por %p105, %p106
    %s109 = sadd.s32 %s108, 1
    %p112 = scmp.eq.s32.totalorder %s18, 1
    %p113 = scmp.ne.s32.totalorder %s108, %s110
    %p114 = scmp.eq.s32.totalorder %s18, 0
    %p115 = por %p113, %p114
    %p116 = scmp.ne.s32.totalorder %s108, %s110
    %p117 = scmp.eq.s32.totalorder %s23, 1
    %p118 = por %p116, %p117
    %p119 = scmp.ne.s32.totalorder %s110, %s111
    %p120 = scmp.eq.s32.totalorder %s23, 0
    %p121 = por %p119, %p120
    %p122 = scmp.ne.s32.totalorder %s110, %s111
    %p123 = scmp.eq.s32.totalorder %s24, 1
    %p124 = por %p122, %p123
    %p126 = scmp.ne.s32.totalorder %s111, %s125
    %p127 = scmp.eq.s32.totalorder %s24, 0
    %p128 = por %p126, %p127
    %s130 = sadd.s32 %s129, 1
    %p133 = scmp.eq.s32.totalorder %s18, 1
    %p134 = scmp.ne.s32.totalorder %s129, %s131
    %p135 = scmp.eq.s32.totalorder %s18, 0
    %p136 = por %p134, %p135
    %p137 = scmp.ne.s32.totalorder %s129, %s131
    %p138 = scmp.eq.s32.totalorder %s23, 1
    %p139 = por %p137, %p138
    %p140 = scmp.ne.s32.totalorder %s131, %s132
    %p141 = scmp.eq.s32.totalorder %s23, 0
    %p142 = por %p140, %p141
    %p143 = scmp.ne.s32.totalorder %s131, %s132
    %p144 = scmp.eq.s32.totalorder %s24, 1
    %p145 = por %p143, %p144
    %p147 = scmp.ne.s32.totalorder %s132, %s146
    %p148 = scmp.eq.s32.totalorder %s24, 0
    %p149 = por %p147, %p148
    %s151 = sadd.s32 %s150, 1
    %p154 = scmp.eq.s32.totalorder %s18, 1
    %p155 = scmp.ne.s32.totalorder %s150, %s152
    %p156 = scmp.eq.s32.totalorder %s18, 0
    %p157 = por %p155, %p156
    %p158 = scmp.ne.s32.totalorder %s150, %s152
    %p159 = scmp.eq.s32.totalorder %s23, 1
    %p160 = por %p158, %p159
    %p161 = scmp.ne.s32.totalorder %s152, %s153
    %p162 = scmp.eq.s32.totalorder %s23, 0
    %p163 = por %p161, %p162
    %p164 = scmp.ne.s32.totalorder %s152, %s153
    %p165 = scmp.eq.s32.totalorder %s24, 1
    %p166 = por %p164, %p165
    %p168 = scmp.ne.s32.totalorder %s153, %s167
    %p169 = scmp.eq.s32.totalorder %s24, 0
    %p170 = por %p168, %p169
    %s172 = sadd.s32 %s171, 1
    %p175 = scmp.eq.s32.totalorder %s18, 1
    %p176 = scmp.ne.s32.totalorder %s171, %s173
    %p177 = scmp.eq.s32.totalorder %s18, 0
    %p178 = por %p176, %p177
    %p179 = scmp.ne.s32.totalorder %s171, %s173
    %p180 = scmp.eq.s32.totalorder %s23, 1
    %p181 = por %p179, %p180
    %p182 = scmp.ne.s32.totalorder %s173, %s174
    %p183 = scmp.eq.s32.totalorder %s23, 0
    %p184 = por %p182, %p183
    %p185 = scmp.ne.s32.totalorder %s173, %s174
    %p186 = scmp.eq.s32.totalorder %s24, 1
    %p187 = por %p185, %p186
    %p189 = scmp.ne.s32.totalorder %s174, %s188
    %p190 = scmp.eq.s32.totalorder %s24, 0
    %p191 = por %p189, %p190
    %s193 = sadd.s32 %s192, 1
    %p196 = scmp.eq.s32.totalorder %s18, 1
    %p197 = scmp.ne.s32.totalorder %s192, %s194
    %p198 = scmp.eq.s32.totalorder %s18, 0
    %p199 = por %p197, %p198
    %p200 = scmp.ne.s32.totalorder %s192, %s194
    %p201 = scmp.eq.s32.totalorder %s23, 1
    %p202 = por %p200, %p201
    %p203 = scmp.ne.s32.totalorder %s194, %s195
    %p204 = scmp.eq.s32.totalorder %s23, 0
    %p205 = por %p203, %p204
    %p206 = scmp.ne.s32.totalorder %s194, %s195
    %p207 = scmp.eq.s32.totalorder %s24, 1
    %p208 = por %p206, %p207
    %p210 = scmp.ne.s32.totalorder %s195, %s209
    %p211 = scmp.eq.s32.totalorder %s24, 0
    %p212 = por %p210, %p211
    %s214 = sadd.s32 %s213, 1
    %p217 = scmp.eq.s32.totalorder %s18, 1
    %p218 = scmp.ne.s32.totalorder %s213, %s215
    %p219 = scmp.eq.s32.totalorder %s18, 0
    %p220 = por %p218, %p219
    %p221 = scmp.ne.s32.totalorder %s213, %s215
    %p222 = scmp.eq.s32.totalorder %s23, 1
    %p223 = por %p221, %p222
    %p224 = scmp.ne.s32.totalorder %s215, %s216
    %p225 = scmp.eq.s32.totalorder %s23, 0
    %p226 = por %p224, %p225
    %p227 = scmp.ne.s32.totalorder %s215, %s216
    %p228 = scmp.eq.s32.totalorder %s24, 1
    %p229 = por %p227, %p228
    %p231 = scmp.ne.s32.totalorder %s216, %s230
    %p232 = scmp.eq.s32.totalorder %s24, 0
    %p233 = por %p231, %p232
    %s235 = sadd.s32 %s234, 1
    %p238 = scmp.eq.s32.totalorder %s18, 1
    %p239 = scmp.ne.s32.totalorder %s234, %s236
    %p240 = scmp.eq.s32.totalorder %s18, 0
    %p241 = por %p239, %p240
    %p242 = scmp.ne.s32.totalorder %s234, %s236
    %p243 = scmp.eq.s32.totalorder %s23, 1
    %p244 = por %p242, %p243
    %p245 = scmp.ne.s32.totalorder %s236, %s237
    %p246 = scmp.eq.s32.totalorder %s23, 0
    %p247 = por %p245, %p246
    %p248 = scmp.ne.s32.totalorder %s236, %s237
    %p249 = scmp.eq.s32.totalorder %s24, 1
    %p250 = por %p248, %p249
    %p252 = scmp.ne.s32.totalorder %s237, %s251
    %p253 = scmp.eq.s32.totalorder %s24, 0
    %p254 = por %p252, %p253
    %s256 = sadd.s32 %s255, 1
    %p259 = scmp.eq.s32.totalorder %s18, 1
    %p260 = scmp.ne.s32.totalorder %s255, %s257
    %p261 = scmp.eq.s32.totalorder %s18, 0
    %p262 = por %p260, %p261
    %p263 = scmp.ne.s32.totalorder %s255, %s257
    %p264 = scmp.eq.s32.totalorder %s23, 1
    %p265 = por %p263, %p264
    %p266 = scmp.ne.s32.totalorder %s257, %s258
    %p267 = scmp.eq.s32.totalorder %s23, 0
    %p268 = por %p266, %p267
    %p269 = scmp.ne.s32.totalorder %s257, %s258
    %p270 = scmp.eq.s32.totalorder %s24, 1
    %p271 = por %p269, %p270
    %p273 = scmp.ne.s32.totalorder %s258, %s272
    %p274 = scmp.eq.s32.totalorder %s24, 0
    %p275 = por %p273, %p274
    %s276 = ssub.s32 %s25, %s37
    %p277 = scmp.eq.s32.totalorder %s276, 0
    %s279 = sadd.s32 %s278, 1
    %s280 = scalar_select %p277, %s278, %s279
    %p283 = pneg %p277
    %p284 = scmp.eq.s32.totalorder %s18, 1
    %p285 = por %p283, %p284
    %p286 = scmp.ne.s32.totalorder %s278, %s281
    %p287 = scmp.eq.s32.totalorder %s18, 0
    %p288 = por %p286, %p287
    %p289 = scmp.ne.s32.totalorder %s278, %s281
    %p290 = scmp.eq.s32.totalorder %s23, 1
    %p291 = por %p289, %p290
    %p292 = scmp.ne.s32.totalorder %s281, %s282
    %p293 = scmp.eq.s32.totalorder %s23, 0
    %p294 = por %p292, %p293
    %p295 = scmp.ne.s32.totalorder %s281, %s282
    %p296 = scmp.eq.s32.totalorder %s24, 1
    %p297 = por %p295, %p296
    %p299 = scmp.ne.s32.totalorder %s282, %s298
    %p300 = scmp.eq.s32.totalorder %s24, 0
    %p301 = por %p299, %p300
    %s302 = ssub.s32 %s25, %s37
    %p303 = scmp.eq.s32.totalorder %s302, 0
    %s305 = sadd.s32 %s304, 1
    %s306 = scalar_select %p303, %s304, %s305
    %p309 = pneg %p303
    %p310 = scmp.eq.s32.totalorder %s18, 1
    %p311 = por %p309, %p310
    %p312 = scmp.ne.s32.totalorder %s304, %s307
    %p313 = scmp.eq.s32.totalorder %s18, 0
    %p314 = por %p312, %p313
    %p315 = scmp.ne.s32.totalorder %s304, %s307
    %p316 = scmp.eq.s32.totalorder %s23, 1
    %p317 = por %p315, %p316
    %p318 = scmp.ne.s32.totalorder %s307, %s308
    %p319 = scmp.eq.s32.totalorder %s23, 0
    %p320 = por %p318, %p319
    %p321 = scmp.ne.s32.totalorder %s307, %s308
    %p322 = scmp.eq.s32.totalorder %s24, 1
    %p323 = por %p321, %p322
    %p325 = scmp.ne.s32.totalorder %s308, %s324
    %p326 = scmp.eq.s32.totalorder %s24, 0
    %p327 = por %p325, %p326
    %p328 = scmp.le.s32.totalorder 1, %s18
    %p329 = scmp.lt.s32.totalorder %s18, 3
    %p330 = pnand %p328, %p329
    %p331 = pneg %p330
    // Predicated region
    $region9: #{tpu_custom_call.1} parent=5 // pred_check
      _
    $region10: #{tpu_custom_call.1} parent=5 // pred_check_branch
      %333 = sbr.rel (%p330) target = $region12
    $region11: #{tpu_custom_call.1} parent=5 // pred_region
      %s334 = ssub.s32 %s18, 1
      // Predicated region
      $region13: #{tpu_custom_call.1} parent=11 // pred_check
        %p335 = pneg %p79
      $region14: #{tpu_custom_call.1} parent=11 // pred_check_branch
        %337 = sbr.rel (%p335) target = $region16
      $region15: #{tpu_custom_call.1} parent=11 // pred_region
        _
      $region16: #{tpu_custom_call.1} parent=11 // pred_fallthru
        _
      // Predicated region
      $region17: #{tpu_custom_call.1} parent=11 // pred_check
        %p338 = pneg %p100
      $region18: #{tpu_custom_call.1} parent=11 // pred_check_branch
        %340 = sbr.rel (%p338) target = $region20
      $region19: #{tpu_custom_call.1} parent=11 // pred_region
        _
      $region20: #{tpu_custom_call.1} parent=11 // pred_fallthru
        _
      // Predicated region
      $region21: #{tpu_custom_call.1} parent=11 // pred_check
        %p341 = pneg %p121
      $region22: #{tpu_custom_call.1} parent=11 // pred_check_branch
        %343 = sbr.rel (%p341) target = $region24
      $region23: #{tpu_custom_call.1} parent=11 // pred_region
        _
      $region24: #{tpu_custom_call.1} parent=11 // pred_fallthru
        _
      // Predicated region
      $region25: #{tpu_custom_call.1} parent=11 // pred_check
        %p344 = pneg %p142
      $region26: #{tpu_custom_call.1} parent=11 // pred_check_branch
        %346 = sbr.rel (%p344) target = $region28
      $region27: #{tpu_custom_call.1} parent=11 // pred_region
        _
      $region28: #{tpu_custom_call.1} parent=11 // pred_fallthru
        _
      // Predicated region
      $region29: #{tpu_custom_call.1} parent=11 // pred_check
        %p347 = pneg %p163
      $region30: #{tpu_custom_call.1} parent=11 // pred_check_branch
        %349 = sbr.rel (%p347) target = $region32
      $region31: #{tpu_custom_call.1} parent=11 // pred_region
        _
      $region32: #{tpu_custom_call.1} parent=11 // pred_fallthru
        _
      // Predicated region
      $region33: #{tpu_custom_call.1} parent=11 // pred_check
        %p350 = pneg %p184
      $region34: #{tpu_custom_call.1} parent=11 // pred_check_branch
        %352 = sbr.rel (%p350) target = $region36
      $region35: #{tpu_custom_call.1} parent=11 // pred_region
        _
      $region36: #{tpu_custom_call.1} parent=11 // pred_fallthru
        _
      // Predicated region
      $region37: #{tpu_custom_call.1} parent=11 // pred_check
        %p353 = pneg %p205
      $region38: #{tpu_custom_call.1} parent=11 // pred_check_branch
        %355 = sbr.rel (%p353) target = $region40
      $region39: #{tpu_custom_call.1} parent=11 // pred_region
        _
      $region40: #{tpu_custom_call.1} parent=11 // pred_fallthru
        _
      // Predicated region
      $region41: #{tpu_custom_call.1} parent=11 // pred_check
        %p356 = pneg %p226
      $region42: #{tpu_custom_call.1} parent=11 // pred_check_branch
        %358 = sbr.rel (%p356) target = $region44
      $region43: #{tpu_custom_call.1} parent=11 // pred_region
        _
      $region44: #{tpu_custom_call.1} parent=11 // pred_fallthru
        _
      // Predicated region
      $region45: #{tpu_custom_call.1} parent=11 // pred_check
        %p359 = pneg %p247
      $region46: #{tpu_custom_call.1} parent=11 // pred_check_branch
        %361 = sbr.rel (%p359) target = $region48
      $region47: #{tpu_custom_call.1} parent=11 // pred_region
        _
      $region48: #{tpu_custom_call.1} parent=11 // pred_fallthru
        _
      // Predicated region
      $region49: #{tpu_custom_call.1} parent=11 // pred_check
        %p362 = pneg %p268
      $region50: #{tpu_custom_call.1} parent=11 // pred_check_branch
        %364 = sbr.rel (%p362) target = $region52
      $region51: #{tpu_custom_call.1} parent=11 // pred_region
        _
      $region52: #{tpu_custom_call.1} parent=11 // pred_fallthru
        _
    $region12: #{tpu_custom_call.1} parent=5 // pred_fallthru
      _
    %p365 = scmp.lt.s32.totalorder %s18, 2
    // Predicated region
    $region53: #{tpu_custom_call.1} parent=5 // pred_check
      %p366 = pneg %p365
    $region54: #{tpu_custom_call.1} parent=5 // pred_check_branch
      %368 = sbr.rel (%p366) target = $region56
    $region55: #{tpu_custom_call.1} parent=5 // pred_region
      // Predicated region
      $region57: #{tpu_custom_call.1} parent=55 // pred_check
        %p369 = pneg %p52
      $region58: #{tpu_custom_call.1} parent=55 // pred_check_branch
        %371 = sbr.rel (%p369) target = $region60
      $region59: #{tpu_custom_call.1} parent=55 // pred_region
        %p372 = scmp.lt.s32.totalorder %s25, 1
        %s373 = scalar_select %p372, %s25, 1
        %p374 = scmp.lt.s32.totalorder %s26, 0
        %s375 = scalar_select %p374, %s26, 0
        %s376 = sadd.s32 %s375, %s373
        %s377 = smul.addr %s376, 4
        %s378 = scalar_lea.vmem %s0, %s377
      $region60: #{tpu_custom_call.1} parent=55 // pred_fallthru
        _
      // Predicated region
      $region61: #{tpu_custom_call.1} parent=55 // pred_check
        %p379 = pneg %p288
      $region62: #{tpu_custom_call.1} parent=55 // pred_check_branch
        %381 = sbr.rel (%p379) target = $region64
      $region63: #{tpu_custom_call.1} parent=55 // pred_region
        %p382 = scmp.lt.s32.totalorder %s25, 1
        %s383 = scalar_select %p382, %s25, 1
        %s384 = smul.addr %s383, 8
        %s385 = scalar_lea.vmem %s11, %s384
      $region64: #{tpu_custom_call.1} parent=55 // pred_fallthru
        _
    $region56: #{tpu_custom_call.1} parent=5 // pred_fallthru
      _
    %p386 = scmp.le.s32.totalorder 1, %s18
    %p387 = scmp.lt.s32.totalorder %s18, 3
    %p388 = pnand %p386, %p387
    %p389 = pneg %p388
    // Predicated region
    $region65: #{tpu_custom_call.1} parent=5 // pred_check
      _
    $region66: #{tpu_custom_call.1} parent=5 // pred_check_branch
      %391 = sbr.rel (%p388) target = $region68
    $region67: #{tpu_custom_call.1} parent=5 // pred_region
      %s392 = ssub.s32 %s18, 1
      %p393 = scmp.lt.s32.totalorder %s27, 1
      %s394 = scalar_select %p393, %s27, 1
      %p395 = scmp.lt.s32.totalorder %s28, 0
      %s396 = scalar_select %p395, %s28, 0
      %s397 = sadd.s32 %s396, %s394
      %s398 = smul.addr %s397, 4
      %s399 = scalar_lea.vmem %s0, %s398
      %p400 = pneg %p58
      %p401 = pneg %p55
      %p402 = pneg %p79
      %p403 = pneg %p76
      %p404 = pneg %p100
      %p405 = pneg %p97
      %p406 = pneg %p121
      %p407 = pneg %p118
      %p408 = pneg %p142
      %p409 = pneg %p139
      %p410 = pneg %p163
      %p411 = pneg %p160
      %p412 = pneg %p184
      %p413 = pneg %p181
      %p414 = pneg %p205
      %p415 = pneg %p202
      %p416 = pneg %p226
      %p417 = pneg %p223
      %p418 = pneg %p247
      %p419 = pneg %p244
      %p420 = pneg %p268
      %p421 = pneg %p265
      %p422 = scmp.lt.s32.totalorder %s27, 1
      %s423 = scalar_select %p422, %s27, 1
      %s424 = smul.addr %s423, 8
      %s425 = scalar_lea.vmem %s11, %s424
      %p426 = pneg %p294
      %p427 = pneg %p291
      %p428 = pneg %p320
      %p429 = pneg %p317
      %p430 = scmp.lt.s32.totalorder %s27, 1
      %s431 = scalar_select %p430, %s27, 1
      %s432 = smul.addr %s431, 8
      %s433 = scalar_lea.vmem %s12, %s432
      %p434 = scmp.lt.s32.totalorder %s27, 1
      %s435 = scalar_select %p434, %s27, 1
      %p436 = scmp.lt.s32.totalorder %s28, 0
      %s437 = scalar_select %p436, %s28, 0
      %s438 = sadd.s32 %s437, %s435
      %s439 = smul.addr %s438, 4
      %s440 = scalar_lea.vmem %s0, %s439
      %p441 = scmp.lt.s32.totalorder %s27, 1
      %s442 = scalar_select %p441, %s27, 1
      %s443 = smul.addr %s442, 8
      %s444 = scalar_lea.vmem %s11, %s443
      %p445 = scmp.lt.s32.totalorder %s27, 1
      %s446 = scalar_select %p445, %s27, 1
      %s447 = smul.addr %s446, 8
      %s448 = scalar_lea.vmem %s12, %s447
      %p450 = scmp.eq.s32.totalorder %s28, 0
      // Predicated region
      $region69: #{tpu_custom_call.1} parent=67 // pred_check
        %p451 = pneg %p450
      $region70: #{tpu_custom_call.1} parent=67 // pred_check_branch
        %453 = sbr.rel (%p451) target = $region72
      $region71: #{tpu_custom_call.1} parent=67 // pred_region
        %vm454 = vcmask 7168
        %455 = vst.msk [vmem:[#allocation2] sm:$0xff] %vm454, -inf
        %456 = vst.msk [vmem:[#allocation2 + $0x8] sm:$0xff] %vm454, -inf
        %457 = vst.msk [vmem:[#allocation2 + $0x10] sm:$0xff] %vm454, -inf
        %458 = vst.msk [vmem:[#allocation2 + $0x18] sm:$0xff] %vm454, -inf
        %459 = vst.msk [vmem:[#allocation2 + $0x20] sm:$0xff] %vm454, -inf
        %460 = vst.msk [vmem:[#allocation2 + $0x28] sm:$0xff] %vm454, -inf
        %461 = vst.msk [vmem:[#allocation2 + $0x30] sm:$0xff] %vm454, -inf
        %462 = vst.msk [vmem:[#allocation2 + $0x38] sm:$0xff] %vm454, -inf
        %463 = vst.msk [vmem:[#allocation2 + $0x40] sm:$0xff] %vm454, -inf
        %464 = vst.msk [vmem:[#allocation2 + $0x48] sm:$0xff] %vm454, -inf
        %465 = vst.msk [vmem:[#allocation2 + $0x50] sm:$0xff] %vm454, -inf
        %466 = vst.msk [vmem:[#allocation2 + $0x58] sm:$0xff] %vm454, -inf
        %467 = vst.msk [vmem:[#allocation2 + $0x60] sm:$0xff] %vm454, -inf
        %468 = vst.msk [vmem:[#allocation2 + $0x68] sm:$0xff] %vm454, -inf
        %469 = vst.msk [vmem:[#allocation2 + $0x70] sm:$0xff] %vm454, -inf
        %470 = vst.msk [vmem:[#allocation2 + $0x78] sm:$0xff] %vm454, -inf
      $region72: #{tpu_custom_call.1} parent=67 // pred_fallthru
        _
      %v471 = vld [vmem:[%s440] sm:$0x7]
      %v472 = vld [vmem:[%s1] sm:$0xff]
      %v473 = vld [vmem:[%s1 + $0x8] sm:$0xff]
      %v474 = vld [vmem:[%s1 + $0x10] sm:$0xff]
      %v475 = vld [vmem:[%s1 + $0x18] sm:$0xff]
      %v476 = vld [vmem:[%s2] sm:$0xff]
      %v477 = vld [vmem:[%s2 + $0x8] sm:$0xff]
      %v478 = vld [vmem:[%s2 + $0x10] sm:$0xff]
      %v479 = vld [vmem:[%s2 + $0x18] sm:$0xff]
      %481 = vset.pattern.permute.xlu0 0
      %482 = vperm.xlu0 %481, %v472
      %v483 = vpop.permute.xlu0 %482
      %486 = vset.pattern.permute.xlu0 0
      %487 = vperm.xlu0 %486, %v473
      %v488 = vpop.permute.xlu0 %487
      %491 = vset.pattern.permute.xlu0 0
      %492 = vperm.xlu0 %491, %v474
      %v493 = vpop.permute.xlu0 %492
      %496 = vset.pattern.permute.xlu0 0
      %497 = vperm.xlu0 %496, %v475
      %v498 = vpop.permute.xlu0 %497
      %v500 = vlaneseq
      %v501 = vshrl.u32 %v500, 7
      %v502 = vsub.s32 0, %v501
      %v503 = vrot.slane %v471, %v502
      %v504 = vmul.f32 %v483, %v503
      %v505 = vmul.f32 %v488, %v503
      %v506 = vmul.f32 %v493, %v503
      %v507 = vmul.f32 %v498, %v503
      %508 = vset.pattern.permute.xlu0 1
      %509 = vperm.xlu0 %508, %v472
      %v510 = vpop.permute.xlu0 %509
      %512 = vset.pattern.permute.xlu0 1
      %513 = vperm.xlu0 %512, %v473
      %v514 = vpop.permute.xlu0 %513
      %516 = vset.pattern.permute.xlu0 1
      %517 = vperm.xlu0 %516, %v474
      %v518 = vpop.permute.xlu0 %517
      %520 = vset.pattern.permute.xlu0 1
      %521 = vperm.xlu0 %520, %v475
      %v522 = vpop.permute.xlu0 %521
      %v524 = vlaneseq
      %v525 = vshrl.u32 %v524, 7
      %v526 = vsub.s32 1, %v525
      %v527 = vrot.slane %v471, %v526
      %v528 = vmul.f32 %v510, %v527
      %v529 = vmul.f32 %v514, %v527
      %v530 = vmul.f32 %v518, %v527
      %v531 = vmul.f32 %v522, %v527
      %v532 = vadd.f32 %v504, %v528
      %v533 = vadd.f32 %v505, %v529
      %v534 = vadd.f32 %v506, %v530
      %v535 = vadd.f32 %v507, %v531
      %536 = vset.pattern.permute.xlu0 2
      %537 = vperm.xlu0 %536, %v472
      %v538 = vpop.permute.xlu0 %537
      %540 = vset.pattern.permute.xlu0 2
      %541 = vperm.xlu0 %540, %v473
      %v542 = vpop.permute.xlu0 %541
      %544 = vset.pattern.permute.xlu0 2
      %545 = vperm.xlu0 %544, %v474
      %v546 = vpop.permute.xlu0 %545
      %548 = vset.pattern.permute.xlu0 2
      %549 = vperm.xlu0 %548, %v475
      %v550 = vpop.permute.xlu0 %549
      %v552 = vlaneseq
      %v553 = vshrl.u32 %v552, 7
      %v554 = vsub.s32 2, %v553
      %v555 = vrot.slane %v471, %v554
      %v556 = vmul.f32 %v538, %v555
      %v557 = vmul.f32 %v542, %v555
      %v558 = vmul.f32 %v546, %v555
      %v559 = vmul.f32 %v550, %v555
      %v560 = vadd.f32 %v532, %v556
      %v561 = vadd.f32 %v533, %v557
      %v562 = vadd.f32 %v534, %v558
      %v563 = vadd.f32 %v535, %v559
      %565 = vset.pattern.permute.xlu0 0
      %566 = vperm.xlu0 %565, %v476
      %v567 = vpop.permute.xlu0 %566
      %570 = vset.pattern.permute.xlu0 0
      %571 = vperm.xlu0 %570, %v477
      %v572 = vpop.permute.xlu0 %571
      %575 = vset.pattern.permute.xlu0 0
      %576 = vperm.xlu0 %575, %v478
      %v577 = vpop.permute.xlu0 %576
      %580 = vset.pattern.permute.xlu0 0
      %581 = vperm.xlu0 %580, %v479
      %v582 = vpop.permute.xlu0 %581
      %v584 = vadd.f32 %v560, %v567
      %v585 = vadd.f32 %v561, %v572
      %v586 = vadd.f32 %v562, %v577
      %v587 = vadd.f32 %v563, %v582
      %v588 = vmax.f32 %v584, 0.0
      %v589 = vmax.f32 %v585, 0.0
      %v590 = vmax.f32 %v586, 0.0
      %v591 = vmax.f32 %v587, 0.0
      %v592 = vld [vmem:[%s3] sm:$0xf]
      %v593 = vld [vmem:[%s3 + $0x4] sm:$0xf]
      %v594 = vld [vmem:[%s3 + $0x8] sm:$0xf]
      %v595 = vld [vmem:[%s3 + $0xc] sm:$0xf]
      %v596 = vld [vmem:[%s3 + $0x10] sm:$0xf]
      %v597 = vld [vmem:[%s3 + $0x14] sm:$0xf]
      %v598 = vld [vmem:[%s3 + $0x18] sm:$0xf]
      %v599 = vld [vmem:[%s3 + $0x1c] sm:$0xf]
      %v600 = vld [vmem:[%s4] sm:$0xff]
      %v601 = vld [vmem:[%s4 + $0x8] sm:$0xff]
      %v602 = vld [vmem:[%s4 + $0x10] sm:$0xff]
      %v603 = vld [vmem:[%s4 + $0x18] sm:$0xff]
      %v604 = vld [vmem:[%s4 + $0x20] sm:$0xff]
      %v605 = vld [vmem:[%s4 + $0x28] sm:$0xff]
      %v606 = vld [vmem:[%s4 + $0x30] sm:$0xff]
      %v607 = vld [vmem:[%s4 + $0x38] sm:$0xff]
      %v608 = vpack.c.bf16 %v589, %v588
      %v609 = vpack.c.bf16 %v591, %v590
      %611 = vset.pattern.permute.xlu0 0
      %612 = vperm.xlu0 %611, %v600
      %v613 = vpop.permute.xlu0 %612
      %616 = vset.pattern.permute.xlu0 0
      %617 = vperm.xlu0 %616, %v601
      %v618 = vpop.permute.xlu0 %617
      %621 = vset.pattern.permute.xlu0 0
      %622 = vperm.xlu0 %621, %v602
      %v623 = vpop.permute.xlu0 %622
      %626 = vset.pattern.permute.xlu0 0
      %627 = vperm.xlu0 %626, %v603
      %v628 = vpop.permute.xlu0 %627
      %631 = vset.pattern.permute.xlu0 0
      %632 = vperm.xlu0 %631, %v604
      %v633 = vpop.permute.xlu0 %632
      %636 = vset.pattern.permute.xlu0 0
      %637 = vperm.xlu0 %636, %v605
      %v638 = vpop.permute.xlu0 %637
      %641 = vset.pattern.permute.xlu0 0
      %642 = vperm.xlu0 %641, %v606
      %v643 = vpop.permute.xlu0 %642
      %646 = vset.pattern.permute.xlu0 0
      %647 = vperm.xlu0 %646, %v607
      %v648 = vpop.permute.xlu0 %647
      %v658 = vunpack.c.l.b16 %v592
      %v659 = vunpack.c.l.b16 %v593
      %v660 = vunpack.c.l.b16 %v594
      %v661 = vunpack.c.l.b16 %v595
      %v662 = vunpack.c.l.b16 %v596
      %v663 = vunpack.c.l.b16 %v597
      %v664 = vunpack.c.l.b16 %v598
      %v665 = vunpack.c.l.b16 %v599
      %v666 = vpack.c.b16 %v659, %v658
      %v667 = vpack.c.b16 %v661, %v660
      %v668 = vpack.c.b16 %v663, %v662
      %v669 = vpack.c.b16 %v665, %v664
      %vm670 = vcmask 261120
      %v672 = vsel %vm670, %v666, 0
      %v675 = vsel %vm670, %v667, 0
      %v678 = vsel %vm670, %v668, 0
      %v681 = vsel %vm670, %v669, 0
      %683 = vmatprep.subr.bf16.mxu0 0
      %684 = vmatpush1.bf16.msra.mxu0 %v608
      %685 = vmatprep.subr.bf16.mxu0 0
      %686 = vmatpush1.bf16.msra.mxu0 %v609
      %687 = vmatprep.subr.bf16.mxu0 0
      %688 = vmatpush1.bf16.msra.mxu0 0
      %689 = vmatprep.subr.bf16.mxu0 0
      %690 = vmatpush1.bf16.msra.mxu0 0
      %691 = vmatprep.subr.bf16.mxu0 0
      %692 = vmatpush1.bf16.msra.mxu0 0
      %693 = vmatprep.subr.bf16.mxu0 0
      %694 = vmatpush1.bf16.msra.mxu0 0
      %695 = vmatprep.subr.bf16.mxu0 0
      %696 = vmatpush1.bf16.msra.mxu0 0
      %697 = vmatprep.subr.bf16.mxu0 0
      %698 = vmatpush1.bf16.msra.mxu0 0
      %699 = vmatprep.subr.bf16.mxu0 0
      %700 = vmatpush1.bf16.msra.mxu0 0
      %701 = vmatprep.subr.bf16.mxu0 0
      %702 = vmatpush1.bf16.msra.mxu0 0
      %703 = vmatprep.subr.bf16.mxu0 0
      %704 = vmatpush1.bf16.msra.mxu0 0
      %705 = vmatprep.subr.bf16.mxu0 0
      %706 = vmatpush1.bf16.msra.mxu0 0
      %707 = vmatprep.subr.bf16.mxu0 0
      %708 = vmatpush1.bf16.msra.mxu0 0
      %709 = vmatprep.subr.bf16.mxu0 0
      %710 = vmatpush1.bf16.msra.mxu0 0
      %711 = vmatprep.subr.bf16.mxu0 0
      %712 = vmatpush1.bf16.msra.mxu0 0
      %713 = vmatprep.subr.bf16.mxu0 0
      %714 = vmatpush1.bf16.msra.mxu0 0
      %715 = vmatprep.mubr.bf16.mxu0 0
      %716 = vmatmul.mubr.bf16.gmra.mrb[0].mxu0 %v672
      %v717 = vpop.f32.mrb[0].mxu0
      %v718 = vadd.f32 %v613, %v717
      %v719 = vpop.f32.mrb[0].mxu0
      %v720 = vpop.f32.mrb[0].mxu0
      %v721 = vadd.f32 %v618, %v720
      %v722 = vpop.f32.mrb[0].mxu0
      %723 = vmatprep.mubr.bf16.mxu0 0
      %724 = vmatmul.mubr.bf16.gmra.mrb[0].mxu0 %v675
      %v725 = vpop.f32.mrb[0].mxu0
      %v726 = vadd.f32 %v623, %v725
      %v727 = vpop.f32.mrb[0].mxu0
      %v728 = vpop.f32.mrb[0].mxu0
      %v729 = vadd.f32 %v628, %v728
      %v730 = vpop.f32.mrb[0].mxu0
      %731 = vmatprep.mubr.bf16.mxu0 0
      %732 = vmatmul.mubr.bf16.gmra.mrb[0].mxu0 %v678
      %v733 = vpop.f32.mrb[0].mxu0
      %v734 = vadd.f32 %v633, %v733
      %v735 = vpop.f32.mrb[0].mxu0
      %v736 = vpop.f32.mrb[0].mxu0
      %v737 = vadd.f32 %v638, %v736
      %v738 = vpop.f32.mrb[0].mxu0
      %739 = vmatprep.mubr.bf16.mxu0 0
      %740 = vmatmul.mubr.bf16.gmra.mrb[0].mxu0 %v681
      %v741 = vpop.f32.mrb[0].mxu0
      %v742 = vadd.f32 %v643, %v741
      %v743 = vpop.f32.mrb[0].mxu0
      %v744 = vpop.f32.mrb[0].mxu0
      %v745 = vadd.f32 %v648, %v744
      %v746 = vpop.f32.mrb[0].mxu0
      %747 = vdwg.mxu0
      %v748 = vmax.f32 %v718, 0.0
      %v749 = vmax.f32 %v721, 0.0
      %v750 = vmax.f32 %v726, 0.0
      %v751 = vmax.f32 %v729, 0.0
      %v752 = vmax.f32 %v734, 0.0
      %v753 = vmax.f32 %v737, 0.0
      %v754 = vmax.f32 %v742, 0.0
      %v755 = vmax.f32 %v745, 0.0
      %v756 = vld [vmem:[%s5] sm:$0xf]
      %v757 = vld [vmem:[%s5 + $0x4] sm:$0xf]
      %v758 = vld [vmem:[%s5 + $0x8] sm:$0xf]
      %v759 = vld [vmem:[%s5 + $0xc] sm:$0xf]
      %v760 = vld [vmem:[%s5 + $0x10] sm:$0xf]
      %v761 = vld [vmem:[%s5 + $0x14] sm:$0xf]
      %v762 = vld [vmem:[%s5 + $0x18] sm:$0xf]
      %v763 = vld [vmem:[%s5 + $0x1c] sm:$0xf]
      %v764 = vld [vmem:[%s5 + $0x20] sm:$0xf]
      %v765 = vld [vmem:[%s5 + $0x24] sm:$0xf]
      %v766 = vld [vmem:[%s5 + $0x28] sm:$0xf]
      %v767 = vld [vmem:[%s5 + $0x2c] sm:$0xf]
      %v768 = vld [vmem:[%s5 + $0x30] sm:$0xf]
      %v769 = vld [vmem:[%s5 + $0x34] sm:$0xf]
      %v770 = vld [vmem:[%s5 + $0x38] sm:$0xf]
      %v771 = vld [vmem:[%s5 + $0x3c] sm:$0xf]
      %v772 = vld [vmem:[%s6] sm:$0xff]
      %v773 = vld [vmem:[%s6 + $0x8] sm:$0xff]
      %v774 = vld [vmem:[%s6 + $0x10] sm:$0xff]
      %v775 = vld [vmem:[%s6 + $0x18] sm:$0xff]
      %v776 = vld [vmem:[%s6 + $0x20] sm:$0xff]
      %v777 = vld [vmem:[%s6 + $0x28] sm:$0xff]
      %v778 = vld [vmem:[%s6 + $0x30] sm:$0xff]
      %v779 = vld [vmem:[%s6 + $0x38] sm:$0xff]
      %v780 = vld [vmem:[%s6 + $0x40] sm:$0xff]
      %v781 = vld [vmem:[%s6 + $0x48] sm:$0xff]
      %v782 = vld [vmem:[%s6 + $0x50] sm:$0xff]
      %v783 = vld [vmem:[%s6 + $0x58] sm:$0xff]
      %v784 = vld [vmem:[%s6 + $0x60] sm:$0xff]
      %v785 = vld [vmem:[%s6 + $0x68] sm:$0xff]
      %v786 = vld [vmem:[%s6 + $0x70] sm:$0xff]
      %v787 = vld [vmem:[%s6 + $0x78] sm:$0xff]
      %v788 = vpack.c.bf16 %v749, %v748
      %v789 = vpack.c.bf16 %v751, %v750
      %v790 = vpack.c.bf16 %v753, %v752
      %v791 = vpack.c.bf16 %v755, %v754
      %793 = vset.pattern.permute.xlu0 0
      %794 = vperm.xlu0 %793, %v772
      %v795 = vpop.permute.xlu0 %794
      %798 = vset.pattern.permute.xlu0 0
      %799 = vperm.xlu0 %798, %v773
      %v800 = vpop.permute.xlu0 %799
      %803 = vset.pattern.permute.xlu0 0
      %804 = vperm.xlu0 %803, %v774
      %v805 = vpop.permute.xlu0 %804
      %808 = vset.pattern.permute.xlu0 0
      %809 = vperm.xlu0 %808, %v775
      %v810 = vpop.permute.xlu0 %809
      %813 = vset.pattern.permute.xlu0 0
      %814 = vperm.xlu0 %813, %v776
      %v815 = vpop.permute.xlu0 %814
      %818 = vset.pattern.permute.xlu0 0
      %819 = vperm.xlu0 %818, %v777
      %v820 = vpop.permute.xlu0 %819
      %823 = vset.pattern.permute.xlu0 0
      %824 = vperm.xlu0 %823, %v778
      %v825 = vpop.permute.xlu0 %824
      %828 = vset.pattern.permute.xlu0 0
      %829 = vperm.xlu0 %828, %v779
      %v830 = vpop.permute.xlu0 %829
      %833 = vset.pattern.permute.xlu0 0
      %834 = vperm.xlu0 %833, %v780
      %v835 = vpop.permute.xlu0 %834
      %838 = vset.pattern.permute.xlu0 0
      %839 = vperm.xlu0 %838, %v781
      %v840 = vpop.permute.xlu0 %839
      %843 = vset.pattern.permute.xlu0 0
      %844 = vperm.xlu0 %843, %v782
      %v845 = vpop.permute.xlu0 %844
      %848 = vset.pattern.permute.xlu0 0
      %849 = vperm.xlu0 %848, %v783
      %v850 = vpop.permute.xlu0 %849
      %853 = vset.pattern.permute.xlu0 0
      %854 = vperm.xlu0 %853, %v784
      %v855 = vpop.permute.xlu0 %854
      %858 = vset.pattern.permute.xlu0 0
      %859 = vperm.xlu0 %858, %v785
      %v860 = vpop.permute.xlu0 %859
      %863 = vset.pattern.permute.xlu0 0
      %864 = vperm.xlu0 %863, %v786
      %v865 = vpop.permute.xlu0 %864
      %868 = vset.pattern.permute.xlu0 0
      %869 = vperm.xlu0 %868, %v787
      %v870 = vpop.permute.xlu0 %869
      %v888 = vunpack.c.l.b16 %v756
      %v889 = vunpack.c.l.b16 %v757
      %v890 = vunpack.c.l.b16 %v758
      %v891 = vunpack.c.l.b16 %v759
      %v892 = vunpack.c.l.b16 %v760
      %v893 = vunpack.c.l.b16 %v761
      %v894 = vunpack.c.l.b16 %v762
      %v895 = vunpack.c.l.b16 %v763
      %v896 = vunpack.c.l.b16 %v764
      %v897 = vunpack.c.l.b16 %v765
      %v898 = vunpack.c.l.b16 %v766
      %v899 = vunpack.c.l.b16 %v767
      %v900 = vunpack.c.l.b16 %v768
      %v901 = vunpack.c.l.b16 %v769
      %v902 = vunpack.c.l.b16 %v770
      %v903 = vunpack.c.l.b16 %v771
      %v904 = vpack.c.b16 %v889, %v888
      %v905 = vpack.c.b16 %v891, %v890
      %v906 = vpack.c.b16 %v893, %v892
      %v907 = vpack.c.b16 %v895, %v894
      %v908 = vpack.c.b16 %v897, %v896
      %v909 = vpack.c.b16 %v899, %v898
      %v910 = vpack.c.b16 %v901, %v900
      %v911 = vpack.c.b16 %v903, %v902
      %vm912 = vcmask 523264
      %v914 = vsel %vm912, %v904, 0
      %v917 = vsel %vm912, %v905, 0
      %v920 = vsel %vm912, %v906, 0
      %v923 = vsel %vm912, %v907, 0
      %v926 = vsel %vm912, %v908, 0
      %v929 = vsel %vm912, %v909, 0
      %v932 = vsel %vm912, %v910, 0
      %v935 = vsel %vm912, %v911, 0
      %937 = vmatprep.subr.bf16.mxu0 0
      %938 = vmatpush1.bf16.msra.mxu0 %v788
      %939 = vmatprep.subr.bf16.mxu0 0
      %940 = vmatpush1.bf16.msra.mxu0 %v789
      %941 = vmatprep.subr.bf16.mxu0 0
      %942 = vmatpush1.bf16.msra.mxu0 %v790
      %943 = vmatprep.subr.bf16.mxu0 0
      %944 = vmatpush1.bf16.msra.mxu0 %v791
      %945 = vmatprep.subr.bf16.mxu0 0
      %946 = vmatpush1.bf16.msra.mxu0 0
      %947 = vmatprep.subr.bf16.mxu0 0
      %948 = vmatpush1.bf16.msra.mxu0 0
      %949 = vmatprep.subr.bf16.mxu0 0
      %950 = vmatpush1.bf16.msra.mxu0 0
      %951 = vmatprep.subr.bf16.mxu0 0
      %952 = vmatpush1.bf16.msra.mxu0 0
      %953 = vmatprep.subr.bf16.mxu0 0
      %954 = vmatpush1.bf16.msra.mxu0 0
      %955 = vmatprep.subr.bf16.mxu0 0
      %956 = vmatpush1.bf16.msra.mxu0 0
      %957 = vmatprep.subr.bf16.mxu0 0
      %958 = vmatpush1.bf16.msra.mxu0 0
      %959 = vmatprep.subr.bf16.mxu0 0
      %960 = vmatpush1.bf16.msra.mxu0 0
      %961 = vmatprep.subr.bf16.mxu0 0
      %962 = vmatpush1.bf16.msra.mxu0 0
      %963 = vmatprep.subr.bf16.mxu0 0
      %964 = vmatpush1.bf16.msra.mxu0 0
      %965 = vmatprep.subr.bf16.mxu0 0
      %966 = vmatpush1.bf16.msra.mxu0 0
      %967 = vmatprep.subr.bf16.mxu0 0
      %968 = vmatpush1.bf16.msra.mxu0 0
      %969 = vmatprep.mubr.bf16.mxu0 0
      %970 = vmatmul.mubr.bf16.gmra.mrb[0].mxu0 %v914
      %v971 = vpop.f32.mrb[0].mxu0
      %v972 = vadd.f32 %v795, %v971
      %v973 = vpop.f32.mrb[0].mxu0
      %v974 = vpop.f32.mrb[0].mxu0
      %v975 = vadd.f32 %v800, %v974
      %v976 = vpop.f32.mrb[0].mxu0
      %977 = vmatprep.mubr.bf16.mxu0 0
      %978 = vmatmul.mubr.bf16.gmra.mrb[0].mxu0 %v917
      %v979 = vpop.f32.mrb[0].mxu0
      %v980 = vadd.f32 %v805, %v979
      %v981 = vpop.f32.mrb[0].mxu0
      %v982 = vpop.f32.mrb[0].mxu0
      %v983 = vadd.f32 %v810, %v982
      %v984 = vpop.f32.mrb[0].mxu0
      %985 = vmatprep.mubr.bf16.mxu0 0
      %986 = vmatmul.mubr.bf16.gmra.mrb[0].mxu0 %v920
      %v987 = vpop.f32.mrb[0].mxu0
      %v988 = vadd.f32 %v815, %v987
      %v989 = vpop.f32.mrb[0].mxu0
      %v990 = vpop.f32.mrb[0].mxu0
      %v991 = vadd.f32 %v820, %v990
      %v992 = vpop.f32.mrb[0].mxu0
      %993 = vmatprep.mubr.bf16.mxu0 0
      %994 = vmatmul.mubr.bf16.gmra.mrb[0].mxu0 %v923
      %v995 = vpop.f32.mrb[0].mxu0
      %v996 = vadd.f32 %v825, %v995
      %v997 = vpop.f32.mrb[0].mxu0
      %v998 = vpop.f32.mrb[0].mxu0
      %v999 = vadd.f32 %v830, %v998
      %v1000 = vpop.f32.mrb[0].mxu0
      %1001 = vmatprep.mubr.bf16.mxu0 0
      %1002 = vmatmul.mubr.bf16.gmra.mrb[0].mxu0 %v926
      %v1003 = vpop.f32.mrb[0].mxu0
      %v1004 = vadd.f32 %v835, %v1003
      %v1005 = vpop.f32.mrb[0].mxu0
      %v1006 = vpop.f32.mrb[0].mxu0
      %v1007 = vadd.f32 %v840, %v1006
      %v1008 = vpop.f32.mrb[0].mxu0
      %1009 = vmatprep.mubr.bf16.mxu0 0
      %1010 = vmatmul.mubr.bf16.gmra.mrb[0].mxu0 %v929
      %v1011 = vpop.f32.mrb[0].mxu0
      %v1012 = vadd.f32 %v845, %v1011
      %v1013 = vpop.f32.mrb[0].mxu0
      %v1014 = vpop.f32.mrb[0].mxu0
      %v1015 = vadd.f32 %v850, %v1014
      %v1016 = vpop.f32.mrb[0].mxu0
      %1017 = vmatprep.mubr.bf16.mxu0 0
      %1018 = vmatmul.mubr.bf16.gmra.mrb[0].mxu0 %v932
      %v1019 = vpop.f32.mrb[0].mxu0
      %v1020 = vadd.f32 %v855, %v1019
      %v1021 = vpop.f32.mrb[0].mxu0
      %v1022 = vpop.f32.mrb[0].mxu0
      %v1023 = vadd.f32 %v860, %v1022
      %v1024 = vpop.f32.mrb[0].mxu0
      %1025 = vmatprep.mubr.bf16.mxu0 0
      %1026 = vmatmul.mubr.bf16.gmra.mrb[0].mxu0 %v935
      %v1027 = vpop.f32.mrb[0].mxu0
      %v1028 = vadd.f32 %v865, %v1027
      %v1029 = vpop.f32.mrb[0].mxu0
      %v1030 = vpop.f32.mrb[0].mxu0
      %v1031 = vadd.f32 %v870, %v1030
      %v1032 = vpop.f32.mrb[0].mxu0
      %1033 = vdwg.mxu0
      %v1034 = vmax.f32 %v972, 0.0
      %v1035 = vmax.f32 %v975, 0.0
      %v1036 = vmax.f32 %v980, 0.0
      %v1037 = vmax.f32 %v983, 0.0
      %v1038 = vmax.f32 %v988, 0.0
      %v1039 = vmax.f32 %v991, 0.0
      %v1040 = vmax.f32 %v996, 0.0
      %v1041 = vmax.f32 %v999, 0.0
      %v1042 = vmax.f32 %v1004, 0.0
      %v1043 = vmax.f32 %v1007, 0.0
      %v1044 = vmax.f32 %v1012, 0.0
      %v1045 = vmax.f32 %v1015, 0.0
      %v1046 = vmax.f32 %v1020, 0.0
      %v1047 = vmax.f32 %v1023, 0.0
      %v1048 = vmax.f32 %v1028, 0.0
      %v1049 = vmax.f32 %v1031, 0.0
      %v1050 = vld [vmem:[#allocation2] sm:$0xff]
      %v1051 = vld [vmem:[#allocation2 + $0x8] sm:$0xff]
      %v1052 = vld [vmem:[#allocation2 + $0x10] sm:$0xff]
      %v1053 = vld [vmem:[#allocation2 + $0x18] sm:$0xff]
      %v1054 = vld [vmem:[#allocation2 + $0x20] sm:$0xff]
      %v1055 = vld [vmem:[#allocation2 + $0x28] sm:$0xff]
      %v1056 = vld [vmem:[#allocation2 + $0x30] sm:$0xff]
      %v1057 = vld [vmem:[#allocation2 + $0x38] sm:$0xff]
      %v1058 = vld [vmem:[#allocation2 + $0x40] sm:$0xff]
      %v1059 = vld [vmem:[#allocation2 + $0x48] sm:$0xff]
      %v1060 = vld [vmem:[#allocation2 + $0x50] sm:$0xff]
      %v1061 = vld [vmem:[#allocation2 + $0x58] sm:$0xff]
      %v1062 = vld [vmem:[#allocation2 + $0x60] sm:$0xff]
      %v1063 = vld [vmem:[#allocation2 + $0x68] sm:$0xff]
      %v1064 = vld [vmem:[#allocation2 + $0x70] sm:$0xff]
      %v1065 = vld [vmem:[#allocation2 + $0x78] sm:$0xff]
      %vm1066 = vcmask 130048
      %v1067 = vsel %vm1066, %v1034, -inf
      %1068 = vmax.xlane.f32.xlu0 %v1067
      %v1069 = vpop.xlane.xlu0 %1068
      %v1070 = vsel %vm1066, %v1035, -inf
      %1071 = vmax.xlane.f32.xlu0 %v1070
      %v1072 = vpop.xlane.xlu0 %1071
      %v1073 = vsel %vm1066, %v1036, -inf
      %1074 = vmax.xlane.f32.xlu0 %v1073
      %v1075 = vpop.xlane.xlu0 %1074
      %v1076 = vsel %vm1066, %v1037, -inf
      %1077 = vmax.xlane.f32.xlu0 %v1076
      %v1078 = vpop.xlane.xlu0 %1077
      %v1079 = vsel %vm1066, %v1038, -inf
      %1080 = vmax.xlane.f32.xlu0 %v1079
      %v1081 = vpop.xlane.xlu0 %1080
      %v1082 = vsel %vm1066, %v1039, -inf
      %1083 = vmax.xlane.f32.xlu0 %v1082
      %v1084 = vpop.xlane.xlu0 %1083
      %v1085 = vsel %vm1066, %v1040, -inf
      %1086 = vmax.xlane.f32.xlu0 %v1085
      %v1087 = vpop.xlane.xlu0 %1086
      %v1088 = vsel %vm1066, %v1041, -inf
      %1089 = vmax.xlane.f32.xlu0 %v1088
      %v1090 = vpop.xlane.xlu0 %1089
      %v1091 = vsel %vm1066, %v1042, -inf
      %1092 = vmax.xlane.f32.xlu0 %v1091
      %v1093 = vpop.xlane.xlu0 %1092
      %v1094 = vsel %vm1066, %v1043, -inf
      %1095 = vmax.xlane.f32.xlu0 %v1094
      %v1096 = vpop.xlane.xlu0 %1095
      %v1097 = vsel %vm1066, %v1044, -inf
      %1098 = vmax.xlane.f32.xlu0 %v1097
      %v1099 = vpop.xlane.xlu0 %1098
      %v1100 = vsel %vm1066, %v1045, -inf
      %1101 = vmax.xlane.f32.xlu0 %v1100
      %v1102 = vpop.xlane.xlu0 %1101
      %v1103 = vsel %vm1066, %v1046, -inf
      %1104 = vmax.xlane.f32.xlu0 %v1103
      %v1105 = vpop.xlane.xlu0 %1104
      %v1106 = vsel %vm1066, %v1047, -inf
      %1107 = vmax.xlane.f32.xlu0 %v1106
      %v1108 = vpop.xlane.xlu0 %1107
      %v1109 = vsel %vm1066, %v1048, -inf
      %1110 = vmax.xlane.f32.xlu0 %v1109
      %v1111 = vpop.xlane.xlu0 %1110
      %v1112 = vsel %vm1066, %v1049, -inf
      %1113 = vmax.xlane.f32.xlu0 %v1112
      %v1114 = vpop.xlane.xlu0 %1113
      %v1115 = vmax.f32 %v1050, %v1069
      %v1116 = vmax.f32 %v1051, %v1072
      %v1117 = vmax.f32 %v1052, %v1075
      %v1118 = vmax.f32 %v1053, %v1078
      %v1119 = vmax.f32 %v1054, %v1081
      %v1120 = vmax.f32 %v1055, %v1084
      %v1121 = vmax.f32 %v1056, %v1087
      %v1122 = vmax.f32 %v1057, %v1090
      %v1123 = vmax.f32 %v1058, %v1093
      %v1124 = vmax.f32 %v1059, %v1096
      %v1125 = vmax.f32 %v1060, %v1099
      %v1126 = vmax.f32 %v1061, %v1102
      %v1127 = vmax.f32 %v1062, %v1105
      %v1128 = vmax.f32 %v1063, %v1108
      %v1129 = vmax.f32 %v1064, %v1111
      %v1130 = vmax.f32 %v1065, %v1114
      %vm1131 = vcmask 7168
      %1132 = vst.msk [vmem:[#allocation2] sm:$0xff] %vm1131, %v1115
      %1133 = vst.msk [vmem:[#allocation2 + $0x8] sm:$0xff] %vm1131, %v1116
      %1134 = vst.msk [vmem:[#allocation2 + $0x10] sm:$0xff] %vm1131, %v1117
      %1135 = vst.msk [vmem:[#allocation2 + $0x18] sm:$0xff] %vm1131, %v1118
      %1136 = vst.msk [vmem:[#allocation2 + $0x20] sm:$0xff] %vm1131, %v1119
      %1137 = vst.msk [vmem:[#allocation2 + $0x28] sm:$0xff] %vm1131, %v1120
      %1138 = vst.msk [vmem:[#allocation2 + $0x30] sm:$0xff] %vm1131, %v1121
      %1139 = vst.msk [vmem:[#allocation2 + $0x38] sm:$0xff] %vm1131, %v1122
      %1140 = vst.msk [vmem:[#allocation2 + $0x40] sm:$0xff] %vm1131, %v1123
      %1141 = vst.msk [vmem:[#allocation2 + $0x48] sm:$0xff] %vm1131, %v1124
      %1142 = vst.msk [vmem:[#allocation2 + $0x50] sm:$0xff] %vm1131, %v1125
      %1143 = vst.msk [vmem:[#allocation2 + $0x58] sm:$0xff] %vm1131, %v1126
      %1144 = vst.msk [vmem:[#allocation2 + $0x60] sm:$0xff] %vm1131, %v1127
      %1145 = vst.msk [vmem:[#allocation2 + $0x68] sm:$0xff] %vm1131, %v1128
      %1146 = vst.msk [vmem:[#allocation2 + $0x70] sm:$0xff] %vm1131, %v1129
      %1147 = vst.msk [vmem:[#allocation2 + $0x78] sm:$0xff] %vm1131, %v1130
      // Predicated region
      $region73: #{tpu_custom_call.1} parent=67 // pred_check
        %p1148 = pneg %p450
      $region74: #{tpu_custom_call.1} parent=67 // pred_check_branch
        %1150 = sbr.rel (%p1148) target = $region76
      $region75: #{tpu_custom_call.1} parent=67 // pred_region
        %v1151 = vld [vmem:[#allocation2] sm:$0xff]
        %v1152 = vld [vmem:[#allocation2 + $0x8] sm:$0xff]
        %v1153 = vld [vmem:[#allocation2 + $0x10] sm:$0xff]
        %v1154 = vld [vmem:[#allocation2 + $0x18] sm:$0xff]
        %v1155 = vld [vmem:[#allocation2 + $0x20] sm:$0xff]
        %v1156 = vld [vmem:[#allocation2 + $0x28] sm:$0xff]
        %v1157 = vld [vmem:[#allocation2 + $0x30] sm:$0xff]
        %v1158 = vld [vmem:[#allocation2 + $0x38] sm:$0xff]
        %v1159 = vld [vmem:[#allocation2 + $0x40] sm:$0xff]
        %v1160 = vld [vmem:[#allocation2 + $0x48] sm:$0xff]
        %v1161 = vld [vmem:[#allocation2 + $0x50] sm:$0xff]
        %v1162 = vld [vmem:[#allocation2 + $0x58] sm:$0xff]
        %v1163 = vld [vmem:[#allocation2 + $0x60] sm:$0xff]
        %v1164 = vld [vmem:[#allocation2 + $0x68] sm:$0xff]
        %v1165 = vld [vmem:[#allocation2 + $0x70] sm:$0xff]
        %v1166 = vld [vmem:[#allocation2 + $0x78] sm:$0xff]
        %v1167 = vld [vmem:[%s7] sm:$0xff]
        %v1168 = vld [vmem:[%s7 + $0x8] sm:$0xff]
        %v1169 = vld [vmem:[%s7 + $0x10] sm:$0xff]
        %v1170 = vld [vmem:[%s7 + $0x18] sm:$0xff]
        %v1171 = vld [vmem:[%s7 + $0x20] sm:$0xff]
        %v1172 = vld [vmem:[%s7 + $0x28] sm:$0xff]
        %v1173 = vld [vmem:[%s7 + $0x30] sm:$0xff]
        %v1174 = vld [vmem:[%s7 + $0x38] sm:$0xff]
        %v1175 = vld [vmem:[%s8] sm:$0xff]
        %v1176 = vld [vmem:[%s8 + $0x8] sm:$0xff]
        %v1177 = vld [vmem:[%s8 + $0x10] sm:$0xff]
        %v1178 = vld [vmem:[%s8 + $0x18] sm:$0xff]
        %v1179 = vld [vmem:[%s8 + $0x20] sm:$0xff]
        %v1180 = vld [vmem:[%s8 + $0x28] sm:$0xff]
        %v1181 = vld [vmem:[%s8 + $0x30] sm:$0xff]
        %v1182 = vld [vmem:[%s8 + $0x38] sm:$0xff]
        %1183 = vmatprep.subr.mxu0 0.0
        %1184 = vmatpush1.msra.mxu0 %v1151
        %1185 = vmatprep.subr.mxu0 0.0
        %1186 = vmatpush1.msra.mxu0 %v1152
        %1187 = vmatprep.subr.mxu0 0.0
        %1188 = vmatpush1.msra.mxu0 %v1153
        %1189 = vmatprep.subr.mxu0 0.0
        %1190 = vmatpush1.msra.mxu0 %v1154
        %1191 = vmatprep.subr.mxu0 0.0
        %1192 = vmatpush1.msra.mxu0 %v1155
        %1193 = vmatprep.subr.mxu0 0.0
        %1194 = vmatpush1.msra.mxu0 %v1156
        %1195 = vmatprep.subr.mxu0 0.0
        %1196 = vmatpush1.msra.mxu0 %v1157
        %1197 = vmatprep.subr.mxu0 0.0
        %1198 = vmatpush1.msra.mxu0 %v1158
        %1199 = vmatprep.subr.mxu0 0.0
        %1200 = vmatpush1.msra.mxu0 %v1159
        %1201 = vmatprep.subr.mxu0 0.0
        %1202 = vmatpush1.msra.mxu0 %v1160
        %1203 = vmatprep.subr.mxu0 0.0
        %1204 = vmatpush1.msra.mxu0 %v1161
        %1205 = vmatprep.subr.mxu0 0.0
        %1206 = vmatpush1.msra.mxu0 %v1162
        %1207 = vmatprep.subr.mxu0 0.0
        %1208 = vmatpush1.msra.mxu0 %v1163
        %1209 = vmatprep.subr.mxu0 0.0
        %1210 = vmatpush1.msra.mxu0 %v1164
        %1211 = vmatprep.subr.mxu0 0.0
        %1212 = vmatpush1.msra.mxu0 %v1165
        %1213 = vmatprep.subr.mxu0 0.0
        %1214 = vmatpush1.msra.mxu0 %v1166
        %1215 = vmatprep.subr.mxu0 0.0
        %1216 = vmatpush1.msra.mxu0 0.0
        %1217 = vmatprep.subr.mxu0 0.0
        %1218 = vmatpush1.msra.mxu0 0.0
        %1219 = vmatprep.subr.mxu0 0.0
        %1220 = vmatpush1.msra.mxu0 0.0
        %1221 = vmatprep.subr.mxu0 0.0
        %1222 = vmatpush1.msra.mxu0 0.0
        %1223 = vmatprep.subr.mxu0 0.0
        %1224 = vmatpush1.msra.mxu0 0.0
        %1225 = vmatprep.subr.mxu0 0.0
        %1226 = vmatpush1.msra.mxu0 0.0
        %1227 = vmatprep.subr.mxu0 0.0
        %1228 = vmatpush1.msra.mxu0 0.0
        %1229 = vmatprep.subr.mxu0 0.0
        %1230 = vmatpush1.msra.mxu0 0.0
        %1231 = vmatprep.subr.mxu0 0.0
        %1232 = vmatpush1.msra.mxu0 0.0
        %1233 = vmatprep.subr.mxu0 0.0
        %1234 = vmatpush1.msra.mxu0 0.0
        %1235 = vmatprep.subr.mxu0 0.0
        %1236 = vmatpush1.msra.mxu0 0.0
        %1237 = vmatprep.subr.mxu0 0.0
        %1238 = vmatpush1.msra.mxu0 0.0
        %1239 = vmatprep.subr.mxu0 0.0
        %1240 = vmatpush1.msra.mxu0 0.0
        %1241 = vmatprep.subr.mxu0 0.0
        %1242 = vmatpush1.msra.mxu0 0.0
        %1243 = vmatprep.subr.mxu0 0.0
        %1244 = vmatpush1.msra.mxu0 0.0
        %1245 = vmatprep.subr.mxu0 0.0
        %1246 = vmatpush1.msra.mxu0 0.0
        %1247 = vmatprep.mubr.f32.mxu0 0.0
        %1248 = vmatmul.mubr.f32.gmra.mrb[0].mxu0 %v1167
        %v1249 = vpop.f32.mrb[0].mxu0
        %v1250 = vadd.f32 %v1175, %v1249
        %v1251 = vpop.f32.mrb[0].mxu0
        %1252 = vmatprep.mubr.f32.mxu0 0.0
        %1253 = vmatmul.mubr.f32.gmra.mrb[0].mxu0 %v1168
        %v1254 = vpop.f32.mrb[0].mxu0
        %v1255 = vadd.f32 %v1176, %v1254
        %v1256 = vpop.f32.mrb[0].mxu0
        %1257 = vmatprep.mubr.f32.mxu0 0.0
        %1258 = vmatmul.mubr.f32.gmra.mrb[0].mxu0 %v1169
        %v1259 = vpop.f32.mrb[0].mxu0
        %v1260 = vadd.f32 %v1177, %v1259
        %v1261 = vpop.f32.mrb[0].mxu0
        %1262 = vmatprep.mubr.f32.mxu0 0.0
        %1263 = vmatmul.mubr.f32.gmra.mrb[0].mxu0 %v1170
        %v1264 = vpop.f32.mrb[0].mxu0
        %v1265 = vadd.f32 %v1178, %v1264
        %v1266 = vpop.f32.mrb[0].mxu0
        %1267 = vmatprep.mubr.f32.mxu0 0.0
        %1268 = vmatmul.mubr.f32.gmra.mrb[0].mxu0 %v1171
        %v1269 = vpop.f32.mrb[0].mxu0
        %v1270 = vadd.f32 %v1179, %v1269
        %v1271 = vpop.f32.mrb[0].mxu0
        %1272 = vmatprep.mubr.f32.mxu0 0.0
        %1273 = vmatmul.mubr.f32.gmra.mrb[0].mxu0 %v1172
        %v1274 = vpop.f32.mrb[0].mxu0
        %v1275 = vadd.f32 %v1180, %v1274
        %v1276 = vpop.f32.mrb[0].mxu0
        %1277 = vmatprep.mubr.f32.mxu0 0.0
        %1278 = vmatmul.mubr.f32.gmra.mrb[0].mxu0 %v1173
        %v1279 = vpop.f32.mrb[0].mxu0
        %v1280 = vadd.f32 %v1181, %v1279
        %v1281 = vpop.f32.mrb[0].mxu0
        %1282 = vmatprep.mubr.f32.mxu0 0.0
        %1283 = vmatmul.mubr.f32.gmra.mrb[0].mxu0 %v1174
        %v1284 = vpop.f32.mrb[0].mxu0
        %v1285 = vadd.f32 %v1182, %v1284
        %v1286 = vpop.f32.mrb[0].mxu0
        %1287 = vdwg.mxu0
        %v1288 = vmax.f32 %v1250, 0.0
        %v1289 = vmax.f32 %v1255, 0.0
        %v1290 = vmax.f32 %v1260, 0.0
        %v1291 = vmax.f32 %v1265, 0.0
        %v1292 = vmax.f32 %v1270, 0.0
        %v1293 = vmax.f32 %v1275, 0.0
        %v1294 = vmax.f32 %v1280, 0.0
        %v1295 = vmax.f32 %v1285, 0.0
        %v1296 = vld [vmem:[%s9] sm:$0xff]
        %v1297 = vld [vmem:[%s9 + $0x8] sm:$0xff]
        %v1298 = vld [vmem:[%s10] sm:$0xff]
        %v1299 = vld [vmem:[%s10 + $0x8] sm:$0xff]
        %v1301 = vsel %vm912, %v1296, 0
        %v1304 = vsel %vm912, %v1297, 0
        %1306 = vmatprep.subr.mxu0 0.0
        %1307 = vmatpush1.msra.mxu0 %v1288
        %1308 = vmatprep.subr.mxu0 0.0
        %1309 = vmatpush1.msra.mxu0 %v1289
        %1310 = vmatprep.subr.mxu0 0.0
        %1311 = vmatpush1.msra.mxu0 %v1290
        %1312 = vmatprep.subr.mxu0 0.0
        %1313 = vmatpush1.msra.mxu0 %v1291
        %1314 = vmatprep.subr.mxu0 0.0
        %1315 = vmatpush1.msra.mxu0 %v1292
        %1316 = vmatprep.subr.mxu0 0.0
        %1317 = vmatpush1.msra.mxu0 %v1293
        %1318 = vmatprep.subr.mxu0 0.0
        %1319 = vmatpush1.msra.mxu0 %v1294
        %1320 = vmatprep.subr.mxu0 0.0
        %1321 = vmatpush1.msra.mxu0 %v1295
        %1322 = vmatprep.subr.mxu0 0.0
        %1323 = vmatpush1.msra.mxu0 0.0
        %1324 = vmatprep.subr.mxu0 0.0
        %1325 = vmatpush1.msra.mxu0 0.0
        %1326 = vmatprep.subr.mxu0 0.0
        %1327 = vmatpush1.msra.mxu0 0.0
        %1328 = vmatprep.subr.mxu0 0.0
        %1329 = vmatpush1.msra.mxu0 0.0
        %1330 = vmatprep.subr.mxu0 0.0
        %1331 = vmatpush1.msra.mxu0 0.0
        %1332 = vmatprep.subr.mxu0 0.0
        %1333 = vmatpush1.msra.mxu0 0.0
        %1334 = vmatprep.subr.mxu0 0.0
        %1335 = vmatpush1.msra.mxu0 0.0
        %1336 = vmatprep.subr.mxu0 0.0
        %1337 = vmatpush1.msra.mxu0 0.0
        %1338 = vmatprep.subr.mxu0 0.0
        %1339 = vmatpush1.msra.mxu0 0.0
        %1340 = vmatprep.subr.mxu0 0.0
        %1341 = vmatpush1.msra.mxu0 0.0
        %1342 = vmatprep.subr.mxu0 0.0
        %1343 = vmatpush1.msra.mxu0 0.0
        %1344 = vmatprep.subr.mxu0 0.0
        %1345 = vmatpush1.msra.mxu0 0.0
        %1346 = vmatprep.subr.mxu0 0.0
        %1347 = vmatpush1.msra.mxu0 0.0
        %1348 = vmatprep.subr.mxu0 0.0
        %1349 = vmatpush1.msra.mxu0 0.0
        %1350 = vmatprep.subr.mxu0 0.0
        %1351 = vmatpush1.msra.mxu0 0.0
        %1352 = vmatprep.subr.mxu0 0.0
        %1353 = vmatpush1.msra.mxu0 0.0
        %1354 = vmatprep.subr.mxu0 0.0
        %1355 = vmatpush1.msra.mxu0 0.0
        %1356 = vmatprep.subr.mxu0 0.0
        %1357 = vmatpush1.msra.mxu0 0.0
        %1358 = vmatprep.subr.mxu0 0.0
        %1359 = vmatpush1.msra.mxu0 0.0
        %1360 = vmatprep.subr.mxu0 0.0
        %1361 = vmatpush1.msra.mxu0 0.0
        %1362 = vmatprep.subr.mxu0 0.0
        %1363 = vmatpush1.msra.mxu0 0.0
        %1364 = vmatprep.subr.mxu0 0.0
        %1365 = vmatpush1.msra.mxu0 0.0
        %1366 = vmatprep.subr.mxu0 0.0
        %1367 = vmatpush1.msra.mxu0 0.0
        %1368 = vmatprep.subr.mxu0 0.0
        %1369 = vmatpush1.msra.mxu0 0.0
        %1370 = vmatprep.mubr.f32.mxu0 0.0
        %1371 = vmatmul.mubr.f32.gmra.mrb[0].mxu0 %v1301
        %v1372 = vpop.f32.mrb[0].mxu0
        %v1373 = vadd.f32 %v1298, %v1372
        %v1374 = vpop.f32.mrb[0].mxu0
        %1375 = vmatprep.mubr.f32.mxu0 0.0
        %1376 = vmatmul.mubr.f32.gmra.mrb[0].mxu0 %v1304
        %v1377 = vpop.f32.mrb[0].mxu0
        %v1378 = vadd.f32 %v1299, %v1377
        %v1379 = vpop.f32.mrb[0].mxu0
        %1380 = vdwg.mxu0
        %v1381 = vld [vmem:[%s444] sm:$0xff]
        %v1382 = vmul.f32 %v1378, 0.5
        %v1383 = vmul.f32 %v1382, 1.442695
        %v1384 = vpow.pop %v1383
        %v1385 = vmul.f32 %v1381, %v1384
        %v1386 = vadd.f32 %v1373, %v1385
        %1387 = vst.msk [vmem:[%s448] sm:$0xff] %vm1131, %v1386
      $region76: #{tpu_custom_call.1} parent=67 // pred_fallthru
        _
      %p1388 = scmp.lt.s32.totalorder %s27, 1
      %s1389 = scalar_select %p1388, %s27, 1
      %s1390 = smul.addr %s1389, 8
      %s1391 = scalar_lea.vmem %s12, %s1390
      // Predicated region
      $region77: #{tpu_custom_call.1} parent=67 // pred_check
        %p1392 = pneg %p317
      $region78: #{tpu_custom_call.1} parent=67 // pred_check_branch
        %1394 = sbr.rel (%p1392) target = $region80
      $region79: #{tpu_custom_call.1} parent=67 // pred_region
        _
      $region80: #{tpu_custom_call.1} parent=67 // pred_fallthru
        _
    $region68: #{tpu_custom_call.1} parent=5 // pred_fallthru
      _
    %p1395 = scmp.le.s32.totalorder 2, %s18
    // Predicated region
    $region81: #{tpu_custom_call.1} parent=5 // pred_check
      %p1396 = pneg %p1395
    $region82: #{tpu_custom_call.1} parent=5 // pred_check_branch
      %1398 = sbr.rel (%p1396) target = $region84
    $region83: #{tpu_custom_call.1} parent=5 // pred_region
      %s1399 = ssub.s32 %s18, 2
      // Predicated region
      $region85: #{tpu_custom_call.1} parent=83 // pred_check
        %p1400 = pneg %p323
      $region86: #{tpu_custom_call.1} parent=83 // pred_check_branch
        %1402 = sbr.rel (%p1400) target = $region88
      $region87: #{tpu_custom_call.1} parent=83 // pred_region
        %p1403 = scmp.lt.s32.totalorder %s29, 1
        %s1404 = scalar_select %p1403, %s29, 1
        %s1405 = smul.addr %s1404, 8
        %s1406 = scalar_lea.vmem %s12, %s1405
      $region88: #{tpu_custom_call.1} parent=83 // pred_fallthru
        _
    $region84: #{tpu_custom_call.1} parent=5 // pred_fallthru
      _
  $region6: #{tpu_custom_call.1} parent=0 // loop_footer
    %s22 = sadd.s32 1, %s18
  $region7: #{tpu_custom_call.1} parent=0 // loop_footer_branch
    %17 = sbr.rel target = $region3
  $region8: #{tpu_custom_call.1} parent=0 // loop_exit
    _

</llo_original>
